<compile_context>
chip_gen: v6e
topology: v6e:2x2x1
jax: 0.10.0
libtpu: 0.0.40
codegen_flags: <defaults>
</compile_context>

<pallas_src>
import functools

import jax
import jax.numpy as jnp
from jax.experimental import pallas as pl
from jax.experimental.pallas import tpu as pltpu

LANE = 128
SUBLANE = 8


def _round_up(n, m):
    return ((n + m - 1) // m) * m


def _pad2(x, rows, cols):
    return jnp.pad(x, ((0, rows - x.shape[0]), (0, cols - x.shape[1])))


def _rnn_seq_kernel(pre_ref, hid0_ref, w_hh_ref, w_oo_ref, boo_ref,
                    out_ref, hid_out_ref, *, hp, valid_out, compute_dtype):
    """Recurrent part only: two fused (256-wide) MXU dots per timestep.

    pre_ref    : (T, Bp, Hp+Op) f32   precomputed [cat+input] projections (+i2h/i2o biases)
    hid0_ref   : (Bp, Hp)       f32   initial hidden
    w_hh_ref   : (Hp, Hp+Op)    compute_dtype   [W_ih_h | W_io_h]
    w_oo_ref   : (Hp+Op, Op)    compute_dtype   [W_oo_h ; W_oo_o]
    boo_ref    : (1, Op)        f32
    out_ref    : (T, Bp, Op)    f32   per-step log-softmax
    hid_out_ref: (Bp, Hp)       f32   final hidden
    """
    T, bp, _ = pre_ref.shape
    op = out_ref.shape[-1]

    # Weights / bias loaded once; VMEM-resident for the whole sequence.
    w_hh = w_hh_ref[...]
    w_oo = w_oo_ref[...]
    boo = boo_ref[...]

    # Hoisted log-softmax masking constants (computed once, reused every step).
    lane = jax.lax.broadcasted_iota(jnp.int32, (bp, op), 1)
    valid = lane < valid_out
    neg = jnp.float32(-1e30)

    def step(t, hid):
        pre = pre_ref[t]                                       # (Bp, Hp+Op)
        # ho = [hidden_new | out_pre] in one 256-wide dot.
        ho = pre + jnp.dot(hid.astype(compute_dtype), w_hh,
                           preferred_element_type=jnp.float32)
        hidden_new = ho[:, :hp]                                # 128-lane aligned slice
        # o2o on cat([hidden_new, out_pre]) == ho, one 256-deep dot.
        out = jnp.dot(ho.astype(compute_dtype), w_oo,
                      preferred_element_type=jnp.float32) + boo

        # TODO(synk): nn.Dropout(0.1) train-mode would use pltpu.prng_seed /
        # pltpu.prng_random_bits here; implemented as inference-mode identity.

        # Numerically stable log-softmax over the valid (unpadded) lanes.
        out_m = jnp.where(valid, out, neg)
        m = jnp.max(out_m, axis=1, keepdims=True)
        shifted = out_m - m
        lse = jnp.log(jnp.sum(jnp.where(valid, jnp.exp(shifted), 0.0),
                              axis=1, keepdims=True))
        out_ref[t] = shifted - lse
        return hidden_new

    # Hidden state is a plain loop carry; fully unrolled for short sequences.
    hid_final = jax.lax.fori_loop(0, T, step, hid0_ref[...], unroll=T <= 32)
    hid_out_ref[...] = hid_final


@functools.partial(jax.jit, static_argnames=("compute_dtype",))
def rnn_sequence_forward(category, input_seq, hidden0, params,
                         compute_dtype=jnp.float32):
    """Runs the RNN forward over a whole known input sequence in one kernel.

    category:  (B, n_categories)   one-hot, constant across steps
    input_seq: (T, B, input_size)  one-hot letters per step
    hidden0:   (B, hidden_size)
    returns:   (T, B, output_size) per-step log-softmax outputs,
               (B, hidden_size) final hidden
    """
    T, B, input_size = input_seq.shape
    n_categories = category.shape[1]
    hidden_size = hidden0.shape[1]
    (w_i2h_t, b_i2h, w_i2o_t, b_i2o, w_o2o_t, b_o2o) = params
    output_size = b_i2o.shape[1]

    min_sub = 16 if compute_dtype == jnp.bfloat16 else SUBLANE
    Bp = _round_up(B, min_sub)
    Hp = _round_up(hidden_size, LANE)
    Op = _round_up(output_size, LANE)
    HOp = Hp + Op

    nc, isz, hsz = n_categories, input_size, hidden_size

    # --- Hoisted projections: loop-invariant category part + time-parallel
    # input part, done as large well-shaped XLA matmuls outside the kernel.
    cat_h = category @ w_i2h_t[:nc] + b_i2h                       # (B, H)
    cat_o = category @ w_i2o_t[:nc] + b_i2o                       # (B, O)
    inp_flat = input_seq.reshape(T * B, isz)
    inp_h = (inp_flat @ w_i2h_t[nc:nc + isz]).reshape(T, B, hsz)
    inp_o = (inp_flat @ w_i2o_t[nc:nc + isz]).reshape(T, B, output_size)
    pre_h = jnp.pad(cat_h[None] + inp_h,
                    ((0, 0), (0, Bp - B), (0, Hp - hsz)))
    pre_o = jnp.pad(cat_o[None] + inp_o,
                    ((0, 0), (0, Bp - B), (0, Op - output_size)))
    pre_ho = jnp.concatenate([pre_h, pre_o], axis=-1)             # (T, Bp, Hp+Op)

    # --- Recurrent weights packed to MXU-native 256-wide shapes.
    # Zero padding is preserved so padded hidden lanes stay exactly zero.
    wih_h = w_i2h_t[nc + isz:]                                     # (H, H)
    wio_h = w_i2o_t[nc + isz:]                                     # (H, O)
    w_hh = jnp.concatenate([_pad2(wih_h, Hp, Hp), _pad2(wio_h, Hp, Op)],
                           axis=1).astype(compute_dtype)           # (Hp, Hp+Op)
    w_oo = jnp.concatenate([_pad2(w_o2o_t[:hsz], Hp, Op),
                            _pad2(w_o2o_t[hsz:], Op, Op)],
                           axis=0).astype(compute_dtype)           # (Hp+Op, Op)
    boo = _pad2(b_o2o, 1, Op)

    hid0_p = _pad2(hidden0, Bp, Hp)

    kernel = functools.partial(_rnn_seq_kernel, hp=Hp, valid_out=output_size,
                               compute_dtype=compute_dtype)

    def full(shape):
        return pl.BlockSpec(shape, lambda i, _s=shape: (0,) * len(_s))

    out_p, hid_p = pl.pallas_call(
        kernel,
        out_shape=(
            jax.ShapeDtypeStruct((T, Bp, Op), jnp.float32),
            jax.ShapeDtypeStruct((Bp, Hp), jnp.float32),
        ),
        grid_spec=pltpu.PrefetchScalarGridSpec(
            num_scalar_prefetch=0,
            grid=(1,),                       # whole sequence in one invocation
            in_specs=[
                full((T, Bp, HOp)),          # packed precomputed projections
                full((Bp, Hp)),              # initial hidden
                full((Hp, HOp)),             # [W_ih_h | W_io_h]
                full((HOp, Op)),             # [W_oo_h ; W_oo_o]
                full((1, Op)),               # b_o2o
            ],
            out_specs=(
                full((T, Bp, Op)),           # per-step log-probs
                full((Bp, Hp)),              # final hidden
            ),
        ),
        compiler_params=pltpu.CompilerParams(
            dimension_semantics=("arbitrary",)),
    )(pre_ho, hid0_p, w_hh, w_oo, boo)

    return out_p[:, :B, :output_size], hid_p[:B, :hidden_size]


def rnn_forward(category, input_tensor, hidden, params):
    """Single-step API matching the module's forward(category, input, hidden)."""
    out_seq, hid = rnn_sequence_forward(category, input_tensor[None], hidden, params)
    return out_seq[0], hid


def init_params(key, n_categories, input_size, hidden_size, output_size):
    """Deterministic PyTorch-Linear-style uniform init. Weights returned transposed."""
    def linear(key, fan_in, fan_out):
        kw, kb = jax.random.split(key)
        bound = 1.0 / jnp.sqrt(jnp.float32(fan_in))
        # W stored as (fan_in, fan_out) == torch weight.T
        w = jax.random.uniform(kw, (fan_in, fan_out), jnp.float32, -bound, bound)
        b = jax.random.uniform(kb, (1, fan_out), jnp.float32, -bound, bound)
        return w, b

    k1, k2, k3 = jax.random.split(key, 3)
    comb = n_categories + input_size + hidden_size
    w_i2h_t, b_i2h = linear(k1, comb, hidden_size)
    w_i2o_t, b_i2o = linear(k2, comb, output_size)
    w_o2o_t, b_o2o = linear(k3, hidden_size + output_size, output_size)
    return (w_i2h_t, b_i2h, w_i2o_t, b_i2o, w_o2o_t, b_o2o)


def reference_step(category, input_tensor, hidden, params):
    """Pure-JAX reference for one forward step (matches the PyTorch module)."""
    (w_i2h_t, b_i2h, w_i2o_t, b_i2o, w_o2o_t, b_o2o) = params
    combined = jnp.concatenate([category, input_tensor, hidden], axis=1)
    hidden_new = combined @ w_i2h_t + b_i2h
    out = combined @ w_i2o_t + b_i2o
    out = jnp.concatenate([hidden_new, out], axis=1) @ w_o2o_t + b_o2o
    out = jax.nn.log_softmax(out, axis=1)
    return out, hidden_new


def reference_sequence(category, input_seq, hidden, params):
    outs = []
    for t in range(input_seq.shape[0]):
        out, hidden = reference_step(category, input_seq[t], hidden, params)
        outs.append(out)
    return jnp.stack(outs, axis=0), hidden


if __name__ == "__main__":
    # Small shapes consistent with the module: one-hot category / letter inputs.
    n_categories = 4      # e.g. 4 language categories
    n_letters = 16        # alphabet size (input_size == output_size == n_letters)
    input_size = n_letters
    hidden_size = 32
    output_size = n_letters
    batch = 2
    seq_len = 8           # number of fused RNN steps

    key = jax.random.PRNGKey(0)
    k_params, k_cat, k_letters = jax.random.split(key, 3)

    params = init_params(k_params, n_categories, input_size,
                         hidden_size, output_size)

    cat_idx = jax.random.randint(k_cat, (batch,), 0, n_categories)
    let_idx = jax.random.randint(k_letters, (seq_len, batch), 0, n_letters)
    category = jax.nn.one_hot(cat_idx, n_categories, dtype=jnp.float32)
    input_seq = jax.nn.one_hot(let_idx, n_letters, dtype=jnp.float32)
    hidden0 = jnp.zeros((batch, hidden_size), jnp.float32)   # init_hidden()

    # Fused-sequence kernel (one pallas_call, one kernel invocation for all steps).
    out_seq, hid = rnn_sequence_forward(category, input_seq, hidden0, params)
    out_seq, hid = jax.block_until_ready((out_seq, hid))

    ref_out_seq, ref_hid = reference_sequence(category, input_seq, hidden0, params)
    assert jnp.allclose(out_seq, ref_out_seq, atol=1e-5, rtol=1e-5), "seq output mismatch"
    assert jnp.allclose(hid, ref_hid, atol=1e-5, rtol=1e-5), "seq hidden mismatch"

    # Single-step API matching the module's forward signature.
    out1, hid1 = rnn_forward(category, input_seq[0], hidden0, params)
    out1, hid1 = jax.block_until_ready((out1, hid1))
    ref_out1, ref_hid1 = reference_step(category, input_seq[0], hidden0, params)
    assert jnp.allclose(out1, ref_out1, atol=1e-5, rtol=1e-5), "step output mismatch"
    assert jnp.allclose(hid1, ref_hid1, atol=1e-5, rtol=1e-5), "step hidden mismatch"

    # Optional bf16 compute path (v6e/v7x lever): bf16 matmul inputs, f32
    # accumulation / hidden carry / log-softmax.  Loose tolerance vs. the f32
    # reference since bf16 rounding is expected.
    out_bf, hid_bf = rnn_sequence_forward(category, input_seq, hidden0, params,
                                          compute_dtype=jnp.bfloat16)
    out_bf, hid_bf = jax.block_until_ready((out_bf, hid_bf))
    assert jnp.allclose(out_bf, ref_out_seq, atol=1e-1), "bf16 seq output mismatch"
    assert jnp.allclose(hid_bf, ref_hid, atol=1e-1), "bf16 seq hidden mismatch"

    print("KERNEL_OK")
</pallas_src>

<mosaic_0001>
module attributes {stable_mosaic.version = 11 : i64} {
  func.func @_rnn_seq_kernel(%arg0: i32, %arg1: memref<8x8x256xf32, #tpu.memory_space<vmem>>, %arg2: memref<8x128xf32, #tpu.memory_space<vmem>>, %arg3: memref<128x256xf32, #tpu.memory_space<vmem>>, %arg4: memref<256x128xf32, #tpu.memory_space<vmem>>, %arg5: memref<1x128xf32, #tpu.memory_space<vmem>>, %arg6: memref<8x8x128xf32, #tpu.memory_space<vmem>>, %arg7: memref<8x128xf32, #tpu.memory_space<vmem>>) attributes {dimension_semantics = [#tpu.dimension_semantics<arbitrary>], iteration_bounds = array<i64: 1>, scalar_prefetch = 0 : i64, scratch_operands = 0 : i64, tpu.core_type = #tpu.core_type<tc>, window_params = [{pipeline_mode = #tpu.pipeline_mode<synchronous>, transform_indices = @transform_0, window_bounds = array<i64: 8, 8, 256>}, {pipeline_mode = #tpu.pipeline_mode<synchronous>, transform_indices = @transform_1, window_bounds = array<i64: 8, 128>}, {pipeline_mode = #tpu.pipeline_mode<synchronous>, transform_indices = @transform_2, window_bounds = array<i64: 128, 256>}, {pipeline_mode = #tpu.pipeline_mode<synchronous>, transform_indices = @transform_3, window_bounds = array<i64: 256, 128>}, {pipeline_mode = #tpu.pipeline_mode<synchronous>, transform_indices = @transform_4, window_bounds = array<i64: 1, 128>}, {pipeline_mode = #tpu.pipeline_mode<synchronous>, transform_indices = @transform_5, window_bounds = array<i64: 8, 8, 128>}, {pipeline_mode = #tpu.pipeline_mode<synchronous>, transform_indices = @transform_6, window_bounds = array<i64: 8, 128>}]} {
    %c0 = arith.constant 0 : index
    %c0_0 = arith.constant 0 : index
    %0 = vector.load %arg3[%c0, %c0_0] : memref<128x256xf32, #tpu.memory_space<vmem>>, vector<128x256xf32>
    %c0_1 = arith.constant 0 : index
    %c0_2 = arith.constant 0 : index
    %1 = vector.load %arg4[%c0_1, %c0_2] : memref<256x128xf32, #tpu.memory_space<vmem>>, vector<256x128xf32>
    %c0_3 = arith.constant 0 : index
    %c0_4 = arith.constant 0 : index
    %2 = vector.load %arg5[%c0_3, %c0_4] : memref<1x128xf32, #tpu.memory_space<vmem>>, vector<1x128xf32>
    %3 = tpu.iota {dimensions = array<i32: 1>} : vector<8x128xi32>
    %c16_i32 = arith.constant 16 : i32
    %4 = vector.broadcast %c16_i32 : i32 to vector<8x128xi32>
    %5 = arith.cmpi slt, %3, %4 : vector<8x128xi32>
    %c0_5 = arith.constant 0 : index
    %c0_6 = arith.constant 0 : index
    %6 = vector.load %arg2[%c0_5, %c0_6] : memref<8x128xf32, #tpu.memory_space<vmem>>, vector<8x128xf32>
    %cst = arith.constant -1.000000e+30 : f32
    %c0_i32 = arith.constant 0 : i32
    %7 = arith.index_cast %c0_i32 : i32 to index
    %c0_7 = arith.constant 0 : index
    %c0_8 = arith.constant 0 : index
    %8 = vector.load %arg1[%7, %c0_7, %c0_8] : memref<8x8x256xf32, #tpu.memory_space<vmem>>, vector<1x8x256xf32>
    %9 = vector.shape_cast %8 : vector<1x8x256xf32> to vector<8x256xf32>
    %cst_9 = arith.constant dense<0.000000e+00> : vector<8x256xf32>
    %10 = tpu.matmul %6, %0, %cst_9 {dimension_numbers = #tpu.dot_dimension_numbers<[1], [0], [0], [1], [0, 0, 1, 1], [], []>} : vector<8x128xf32>, vector<128x256xf32>, vector<8x256xf32> -> vector<8x256xf32>
    %11 = arith.addf %9, %10 : vector<8x256xf32>
    %12 = vector.extract_strided_slice %11 {offsets = [0, 0], sizes = [8, 128], strides = [1, 1]} : vector<8x256xf32> to vector<8x128xf32>
    %cst_10 = arith.constant dense<0.000000e+00> : vector<8x128xf32>
    %13 = tpu.matmul %11, %1, %cst_10 {dimension_numbers = #tpu.dot_dimension_numbers<[1], [0], [0], [1], [0, 0, 1, 1], [], []>} : vector<8x256xf32>, vector<256x128xf32>, vector<8x128xf32> -> vector<8x128xf32>
    %14 = vector.broadcast %2 : vector<1x128xf32> to vector<8x128xf32>
    %15 = arith.addf %13, %14 : vector<8x128xf32>
    %16 = vector.broadcast %cst : f32 to vector<8x128xf32>
    %17 = arith.select %5, %15, %16 : vector<8x128xi1>, vector<8x128xf32>
    %cst_11 = arith.constant dense<0xFF800000> : vector<8xf32>
    %18 = vector.multi_reduction <maximumf>, %17, %cst_11 [1] : vector<8x128xf32> to vector<8xf32>
    %19 = vector.shape_cast %18 : vector<8xf32> to vector<8x1xf32>
    %20 = vector.broadcast %19 : vector<8x1xf32> to vector<8x128xf32>
    %21 = arith.subf %17, %20 : vector<8x128xf32>
    %22 = math.exp %21 : vector<8x128xf32>
    %cst_12 = arith.constant 0.000000e+00 : f32
    %23 = vector.broadcast %cst_12 : f32 to vector<8x128xf32>
    %24 = arith.select %5, %22, %23 : vector<8x128xi1>, vector<8x128xf32>
    %cst_13 = arith.constant dense<0.000000e+00> : vector<8xf32>
    %25 = vector.multi_reduction <add>, %24, %cst_13 [1] : vector<8x128xf32> to vector<8xf32>
    %26 = vector.shape_cast %25 : vector<8xf32> to vector<8x1xf32>
    %27 = math.log %26 : vector<8x1xf32>
    %28 = vector.broadcast %27 : vector<8x1xf32> to vector<8x128xf32>
    %29 = arith.subf %21, %28 : vector<8x128xf32>
    %30 = arith.index_cast %c0_i32 : i32 to index
    %c0_14 = arith.constant 0 : index
    %c0_15 = arith.constant 0 : index
    %31 = vector.load %arg6[%30, %c0_14, %c0_15] : memref<8x8x128xf32, #tpu.memory_space<vmem>>, vector<1x8x128xf32>
    %32 = vector.shape_cast %31 : vector<1x8x128xf32> to vector<8x128xf32>
    %33 = vector.shape_cast %29 : vector<8x128xf32> to vector<1x8x128xf32>
    tpu.vector_store %arg6[%30, %c0_14, %c0_15], %33 {strides = array<i32>} : memref<8x8x128xf32, #tpu.memory_space<vmem>>, vector<1x8x128xf32>,
    %c1_i32 = arith.constant 1 : i32
    %34 = arith.index_cast %c1_i32 : i32 to index
    %c0_16 = arith.constant 0 : index
    %c0_17 = arith.constant 0 : index
    %35 = vector.load %arg1[%34, %c0_16, %c0_17] : memref<8x8x256xf32, #tpu.memory_space<vmem>>, vector<1x8x256xf32>
    %36 = vector.shape_cast %35 : vector<1x8x256xf32> to vector<8x256xf32>
    %cst_18 = arith.constant dense<0.000000e+00> : vector<8x256xf32>
    %37 = tpu.matmul %12, %0, %cst_18 {dimension_numbers = #tpu.dot_dimension_numbers<[1], [0], [0], [1], [0, 0, 1, 1], [], []>} : vector<8x128xf32>, vector<128x256xf32>, vector<8x256xf32> -> vector<8x256xf32>
    %38 = arith.addf %36, %37 : vector<8x256xf32>
    %39 = vector.extract_strided_slice %38 {offsets = [0, 0], sizes = [8, 128], strides = [1, 1]} : vector<8x256xf32> to vector<8x128xf32>
    %cst_19 = arith.constant dense<0.000000e+00> : vector<8x128xf32>
    %40 = tpu.matmul %38, %1, %cst_19 {dimension_numbers = #tpu.dot_dimension_numbers<[1], [0], [0], [1], [0, 0, 1, 1], [], []>} : vector<8x256xf32>, vector<256x128xf32>, vector<8x128xf32> -> vector<8x128xf32>
    %41 = vector.broadcast %2 : vector<1x128xf32> to vector<8x128xf32>
    %42 = arith.addf %40, %41 : vector<8x128xf32>
    %43 = vector.broadcast %cst : f32 to vector<8x128xf32>
    %44 = arith.select %5, %42, %43 : vector<8x128xi1>, vector<8x128xf32>
    %cst_20 = arith.constant dense<0xFF800000> : vector<8xf32>
    %45 = vector.multi_reduction <maximumf>, %44, %cst_20 [1] : vector<8x128xf32> to vector<8xf32>
    %46 = vector.shape_cast %45 : vector<8xf32> to vector<8x1xf32>
    %47 = vector.broadcast %46 : vector<8x1xf32> to vector<8x128xf32>
    %48 = arith.subf %44, %47 : vector<8x128xf32>
    %49 = math.exp %48 : vector<8x128xf32>
    %cst_21 = arith.constant 0.000000e+00 : f32
    %50 = vector.broadcast %cst_21 : f32 to vector<8x128xf32>
    %51 = arith.select %5, %49, %50 : vector<8x128xi1>, vector<8x128xf32>
    %cst_22 = arith.constant dense<0.000000e+00> : vector<8xf32>
    %52 = vector.multi_reduction <add>, %51, %cst_22 [1] : vector<8x128xf32> to vector<8xf32>
    %53 = vector.shape_cast %52 : vector<8xf32> to vector<8x1xf32>
    %54 = math.log %53 : vector<8x1xf32>
    %55 = vector.broadcast %54 : vector<8x1xf32> to vector<8x128xf32>
    %56 = arith.subf %48, %55 : vector<8x128xf32>
    %57 = arith.index_cast %c1_i32 : i32 to index
    %c0_23 = arith.constant 0 : index
    %c0_24 = arith.constant 0 : index
    %58 = vector.load %arg6[%57, %c0_23, %c0_24] : memref<8x8x128xf32, #tpu.memory_space<vmem>>, vector<1x8x128xf32>
    %59 = vector.shape_cast %58 : vector<1x8x128xf32> to vector<8x128xf32>
    %60 = vector.shape_cast %56 : vector<8x128xf32> to vector<1x8x128xf32>
    tpu.vector_store %arg6[%57, %c0_23, %c0_24], %60 {strides = array<i32>} : memref<8x8x128xf32, #tpu.memory_space<vmem>>, vector<1x8x128xf32>,
    %c2_i32 = arith.constant 2 : i32
    %61 = arith.index_cast %c2_i32 : i32 to index
    %c0_25 = arith.constant 0 : index
    %c0_26 = arith.constant 0 : index
    %62 = vector.load %arg1[%61, %c0_25, %c0_26] : memref<8x8x256xf32, #tpu.memory_space<vmem>>, vector<1x8x256xf32>
    %63 = vector.shape_cast %62 : vector<1x8x256xf32> to vector<8x256xf32>
    %cst_27 = arith.constant dense<0.000000e+00> : vector<8x256xf32>
    %64 = tpu.matmul %39, %0, %cst_27 {dimension_numbers = #tpu.dot_dimension_numbers<[1], [0], [0], [1], [0, 0, 1, 1], [], []>} : vector<8x128xf32>, vector<128x256xf32>, vector<8x256xf32> -> vector<8x256xf32>
    %65 = arith.addf %63, %64 : vector<8x256xf32>
    %66 = vector.extract_strided_slice %65 {offsets = [0, 0], sizes = [8, 128], strides = [1, 1]} : vector<8x256xf32> to vector<8x128xf32>
    %cst_28 = arith.constant dense<0.000000e+00> : vector<8x128xf32>
    %67 = tpu.matmul %65, %1, %cst_28 {dimension_numbers = #tpu.dot_dimension_numbers<[1], [0], [0], [1], [0, 0, 1, 1], [], []>} : vector<8x256xf32>, vector<256x128xf32>, vector<8x128xf32> -> vector<8x128xf32>
    %68 = vector.broadcast %2 : vector<1x128xf32> to vector<8x128xf32>
    %69 = arith.addf %67, %68 : vector<8x128xf32>
    %70 = vector.broadcast %cst : f32 to vector<8x128xf32>
    %71 = arith.select %5, %69, %70 : vector<8x128xi1>, vector<8x128xf32>
    %cst_29 = arith.constant dense<0xFF800000> : vector<8xf32>
    %72 = vector.multi_reduction <maximumf>, %71, %cst_29 [1] : vector<8x128xf32> to vector<8xf32>
    %73 = vector.shape_cast %72 : vector<8xf32> to vector<8x1xf32>
    %74 = vector.broadcast %73 : vector<8x1xf32> to vector<8x128xf32>
    %75 = arith.subf %71, %74 : vector<8x128xf32>
    %76 = math.exp %75 : vector<8x128xf32>
    %cst_30 = arith.constant 0.000000e+00 : f32
    %77 = vector.broadcast %cst_30 : f32 to vector<8x128xf32>
    %78 = arith.select %5, %76, %77 : vector<8x128xi1>, vector<8x128xf32>
    %cst_31 = arith.constant dense<0.000000e+00> : vector<8xf32>
    %79 = vector.multi_reduction <add>, %78, %cst_31 [1] : vector<8x128xf32> to vector<8xf32>
    %80 = vector.shape_cast %79 : vector<8xf32> to vector<8x1xf32>
    %81 = math.log %80 : vector<8x1xf32>
    %82 = vector.broadcast %81 : vector<8x1xf32> to vector<8x128xf32>
    %83 = arith.subf %75, %82 : vector<8x128xf32>
    %84 = arith.index_cast %c2_i32 : i32 to index
    %c0_32 = arith.constant 0 : index
    %c0_33 = arith.constant 0 : index
    %85 = vector.load %arg6[%84, %c0_32, %c0_33] : memref<8x8x128xf32, #tpu.memory_space<vmem>>, vector<1x8x128xf32>
    %86 = vector.shape_cast %85 : vector<1x8x128xf32> to vector<8x128xf32>
    %87 = vector.shape_cast %83 : vector<8x128xf32> to vector<1x8x128xf32>
    tpu.vector_store %arg6[%84, %c0_32, %c0_33], %87 {strides = array<i32>} : memref<8x8x128xf32, #tpu.memory_space<vmem>>, vector<1x8x128xf32>,
    %c3_i32 = arith.constant 3 : i32
    %88 = arith.index_cast %c3_i32 : i32 to index
    %c0_34 = arith.constant 0 : index
    %c0_35 = arith.constant 0 : index
    %89 = vector.load %arg1[%88, %c0_34, %c0_35] : memref<8x8x256xf32, #tpu.memory_space<vmem>>, vector<1x8x256xf32>
    %90 = vector.shape_cast %89 : vector<1x8x256xf32> to vector<8x256xf32>
    %cst_36 = arith.constant dense<0.000000e+00> : vector<8x256xf32>
    %91 = tpu.matmul %66, %0, %cst_36 {dimension_numbers = #tpu.dot_dimension_numbers<[1], [0], [0], [1], [0, 0, 1, 1], [], []>} : vector<8x128xf32>, vector<128x256xf32>, vector<8x256xf32> -> vector<8x256xf32>
    %92 = arith.addf %90, %91 : vector<8x256xf32>
    %93 = vector.extract_strided_slice %92 {offsets = [0, 0], sizes = [8, 128], strides = [1, 1]} : vector<8x256xf32> to vector<8x128xf32>
    %cst_37 = arith.constant dense<0.000000e+00> : vector<8x128xf32>
    %94 = tpu.matmul %92, %1, %cst_37 {dimension_numbers = #tpu.dot_dimension_numbers<[1], [0], [0], [1], [0, 0, 1, 1], [], []>} : vector<8x256xf32>, vector<256x128xf32>, vector<8x128xf32> -> vector<8x128xf32>
    %95 = vector.broadcast %2 : vector<1x128xf32> to vector<8x128xf32>
    %96 = arith.addf %94, %95 : vector<8x128xf32>
    %97 = vector.broadcast %cst : f32 to vector<8x128xf32>
    %98 = arith.select %5, %96, %97 : vector<8x128xi1>, vector<8x128xf32>
    %cst_38 = arith.constant dense<0xFF800000> : vector<8xf32>
    %99 = vector.multi_reduction <maximumf>, %98, %cst_38 [1] : vector<8x128xf32> to vector<8xf32>
    %100 = vector.shape_cast %99 : vector<8xf32> to vector<8x1xf32>
    %101 = vector.broadcast %100 : vector<8x1xf32> to vector<8x128xf32>
    %102 = arith.subf %98, %101 : vector<8x128xf32>
    %103 = math.exp %102 : vector<8x128xf32>
    %cst_39 = arith.constant 0.000000e+00 : f32
    %104 = vector.broadcast %cst_39 : f32 to vector<8x128xf32>
    %105 = arith.select %5, %103, %104 : vector<8x128xi1>, vector<8x128xf32>
    %cst_40 = arith.constant dense<0.000000e+00> : vector<8xf32>
    %106 = vector.multi_reduction <add>, %105, %cst_40 [1] : vector<8x128xf32> to vector<8xf32>
    %107 = vector.shape_cast %106 : vector<8xf32> to vector<8x1xf32>
    %108 = math.log %107 : vector<8x1xf32>
    %109 = vector.broadcast %108 : vector<8x1xf32> to vector<8x128xf32>
    %110 = arith.subf %102, %109 : vector<8x128xf32>
    %111 = arith.index_cast %c3_i32 : i32 to index
    %c0_41 = arith.constant 0 : index
    %c0_42 = arith.constant 0 : index
    %112 = vector.load %arg6[%111, %c0_41, %c0_42] : memref<8x8x128xf32, #tpu.memory_space<vmem>>, vector<1x8x128xf32>
    %113 = vector.shape_cast %112 : vector<1x8x128xf32> to vector<8x128xf32>
    %114 = vector.shape_cast %110 : vector<8x128xf32> to vector<1x8x128xf32>
    tpu.vector_store %arg6[%111, %c0_41, %c0_42], %114 {strides = array<i32>} : memref<8x8x128xf32, #tpu.memory_space<vmem>>, vector<1x8x128xf32>,
    %c4_i32 = arith.constant 4 : i32
    %115 = arith.index_cast %c4_i32 : i32 to index
    %c0_43 = arith.constant 0 : index
    %c0_44 = arith.constant 0 : index
    %116 = vector.load %arg1[%115, %c0_43, %c0_44] : memref<8x8x256xf32, #tpu.memory_space<vmem>>, vector<1x8x256xf32>
    %117 = vector.shape_cast %116 : vector<1x8x256xf32> to vector<8x256xf32>
    %cst_45 = arith.constant dense<0.000000e+00> : vector<8x256xf32>
    %118 = tpu.matmul %93, %0, %cst_45 {dimension_numbers = #tpu.dot_dimension_numbers<[1], [0], [0], [1], [0, 0, 1, 1], [], []>} : vector<8x128xf32>, vector<128x256xf32>, vector<8x256xf32> -> vector<8x256xf32>
    %119 = arith.addf %117, %118 : vector<8x256xf32>
    %120 = vector.extract_strided_slice %119 {offsets = [0, 0], sizes = [8, 128], strides = [1, 1]} : vector<8x256xf32> to vector<8x128xf32>
    %cst_46 = arith.constant dense<0.000000e+00> : vector<8x128xf32>
    %121 = tpu.matmul %119, %1, %cst_46 {dimension_numbers = #tpu.dot_dimension_numbers<[1], [0], [0], [1], [0, 0, 1, 1], [], []>} : vector<8x256xf32>, vector<256x128xf32>, vector<8x128xf32> -> vector<8x128xf32>
    %122 = vector.broadcast %2 : vector<1x128xf32> to vector<8x128xf32>
    %123 = arith.addf %121, %122 : vector<8x128xf32>
    %124 = vector.broadcast %cst : f32 to vector<8x128xf32>
    %125 = arith.select %5, %123, %124 : vector<8x128xi1>, vector<8x128xf32>
    %cst_47 = arith.constant dense<0xFF800000> : vector<8xf32>
    %126 = vector.multi_reduction <maximumf>, %125, %cst_47 [1] : vector<8x128xf32> to vector<8xf32>
    %127 = vector.shape_cast %126 : vector<8xf32> to vector<8x1xf32>
    %128 = vector.broadcast %127 : vector<8x1xf32> to vector<8x128xf32>
    %129 = arith.subf %125, %128 : vector<8x128xf32>
    %130 = math.exp %129 : vector<8x128xf32>
    %cst_48 = arith.constant 0.000000e+00 : f32
    %131 = vector.broadcast %cst_48 : f32 to vector<8x128xf32>
    %132 = arith.select %5, %130, %131 : vector<8x128xi1>, vector<8x128xf32>
    %cst_49 = arith.constant dense<0.000000e+00> : vector<8xf32>
    %133 = vector.multi_reduction <add>, %132, %cst_49 [1] : vector<8x128xf32> to vector<8xf32>
    %134 = vector.shape_cast %133 : vector<8xf32> to vector<8x1xf32>
    %135 = math.log %134 : vector<8x1xf32>
    %136 = vector.broadcast %135 : vector<8x1xf32> to vector<8x128xf32>
    %137 = arith.subf %129, %136 : vector<8x128xf32>
    %138 = arith.index_cast %c4_i32 : i32 to index
    %c0_50 = arith.constant 0 : index
    %c0_51 = arith.constant 0 : index
    %139 = vector.load %arg6[%138, %c0_50, %c0_51] : memref<8x8x128xf32, #tpu.memory_space<vmem>>, vector<1x8x128xf32>
    %140 = vector.shape_cast %139 : vector<1x8x128xf32> to vector<8x128xf32>
    %141 = vector.shape_cast %137 : vector<8x128xf32> to vector<1x8x128xf32>
    tpu.vector_store %arg6[%138, %c0_50, %c0_51], %141 {strides = array<i32>} : memref<8x8x128xf32, #tpu.memory_space<vmem>>, vector<1x8x128xf32>,
    %c5_i32 = arith.constant 5 : i32
    %142 = arith.index_cast %c5_i32 : i32 to index
    %c0_52 = arith.constant 0 : index
    %c0_53 = arith.constant 0 : index
    %143 = vector.load %arg1[%142, %c0_52, %c0_53] : memref<8x8x256xf32, #tpu.memory_space<vmem>>, vector<1x8x256xf32>
    %144 = vector.shape_cast %143 : vector<1x8x256xf32> to vector<8x256xf32>
    %cst_54 = arith.constant dense<0.000000e+00> : vector<8x256xf32>
    %145 = tpu.matmul %120, %0, %cst_54 {dimension_numbers = #tpu.dot_dimension_numbers<[1], [0], [0], [1], [0, 0, 1, 1], [], []>} : vector<8x128xf32>, vector<128x256xf32>, vector<8x256xf32> -> vector<8x256xf32>
    %146 = arith.addf %144, %145 : vector<8x256xf32>
    %147 = vector.extract_strided_slice %146 {offsets = [0, 0], sizes = [8, 128], strides = [1, 1]} : vector<8x256xf32> to vector<8x128xf32>
    %cst_55 = arith.constant dense<0.000000e+00> : vector<8x128xf32>
    %148 = tpu.matmul %146, %1, %cst_55 {dimension_numbers = #tpu.dot_dimension_numbers<[1], [0], [0], [1], [0, 0, 1, 1], [], []>} : vector<8x256xf32>, vector<256x128xf32>, vector<8x128xf32> -> vector<8x128xf32>
    %149 = vector.broadcast %2 : vector<1x128xf32> to vector<8x128xf32>
    %150 = arith.addf %148, %149 : vector<8x128xf32>
    %151 = vector.broadcast %cst : f32 to vector<8x128xf32>
    %152 = arith.select %5, %150, %151 : vector<8x128xi1>, vector<8x128xf32>
    %cst_56 = arith.constant dense<0xFF800000> : vector<8xf32>
    %153 = vector.multi_reduction <maximumf>, %152, %cst_56 [1] : vector<8x128xf32> to vector<8xf32>
    %154 = vector.shape_cast %153 : vector<8xf32> to vector<8x1xf32>
    %155 = vector.broadcast %154 : vector<8x1xf32> to vector<8x128xf32>
    %156 = arith.subf %152, %155 : vector<8x128xf32>
    %157 = math.exp %156 : vector<8x128xf32>
    %cst_57 = arith.constant 0.000000e+00 : f32
    %158 = vector.broadcast %cst_57 : f32 to vector<8x128xf32>
    %159 = arith.select %5, %157, %158 : vector<8x128xi1>, vector<8x128xf32>
    %cst_58 = arith.constant dense<0.000000e+00> : vector<8xf32>
    %160 = vector.multi_reduction <add>, %159, %cst_58 [1] : vector<8x128xf32> to vector<8xf32>
    %161 = vector.shape_cast %160 : vector<8xf32> to vector<8x1xf32>
    %162 = math.log %161 : vector<8x1xf32>
    %163 = vector.broadcast %162 : vector<8x1xf32> to vector<8x128xf32>
    %164 = arith.subf %156, %163 : vector<8x128xf32>
    %165 = arith.index_cast %c5_i32 : i32 to index
    %c0_59 = arith.constant 0 : index
    %c0_60 = arith.constant 0 : index
    %166 = vector.load %arg6[%165, %c0_59, %c0_60] : memref<8x8x128xf32, #tpu.memory_space<vmem>>, vector<1x8x128xf32>
    %167 = vector.shape_cast %166 : vector<1x8x128xf32> to vector<8x128xf32>
    %168 = vector.shape_cast %164 : vector<8x128xf32> to vector<1x8x128xf32>
    tpu.vector_store %arg6[%165, %c0_59, %c0_60], %168 {strides = array<i32>} : memref<8x8x128xf32, #tpu.memory_space<vmem>>, vector<1x8x128xf32>,
    %c6_i32 = arith.constant 6 : i32
    %169 = arith.index_cast %c6_i32 : i32 to index
    %c0_61 = arith.constant 0 : index
    %c0_62 = arith.constant 0 : index
    %170 = vector.load %arg1[%169, %c0_61, %c0_62] : memref<8x8x256xf32, #tpu.memory_space<vmem>>, vector<1x8x256xf32>
    %171 = vector.shape_cast %170 : vector<1x8x256xf32> to vector<8x256xf32>
    %cst_63 = arith.constant dense<0.000000e+00> : vector<8x256xf32>
    %172 = tpu.matmul %147, %0, %cst_63 {dimension_numbers = #tpu.dot_dimension_numbers<[1], [0], [0], [1], [0, 0, 1, 1], [], []>} : vector<8x128xf32>, vector<128x256xf32>, vector<8x256xf32> -> vector<8x256xf32>
    %173 = arith.addf %171, %172 : vector<8x256xf32>
    %174 = vector.extract_strided_slice %173 {offsets = [0, 0], sizes = [8, 128], strides = [1, 1]} : vector<8x256xf32> to vector<8x128xf32>
    %cst_64 = arith.constant dense<0.000000e+00> : vector<8x128xf32>
    %175 = tpu.matmul %173, %1, %cst_64 {dimension_numbers = #tpu.dot_dimension_numbers<[1], [0], [0], [1], [0, 0, 1, 1], [], []>} : vector<8x256xf32>, vector<256x128xf32>, vector<8x128xf32> -> vector<8x128xf32>
    %176 = vector.broadcast %2 : vector<1x128xf32> to vector<8x128xf32>
    %177 = arith.addf %175, %176 : vector<8x128xf32>
    %178 = vector.broadcast %cst : f32 to vector<8x128xf32>
    %179 = arith.select %5, %177, %178 : vector<8x128xi1>, vector<8x128xf32>
    %cst_65 = arith.constant dense<0xFF800000> : vector<8xf32>
    %180 = vector.multi_reduction <maximumf>, %179, %cst_65 [1] : vector<8x128xf32> to vector<8xf32>
    %181 = vector.shape_cast %180 : vector<8xf32> to vector<8x1xf32>
    %182 = vector.broadcast %181 : vector<8x1xf32> to vector<8x128xf32>
    %183 = arith.subf %179, %182 : vector<8x128xf32>
    %184 = math.exp %183 : vector<8x128xf32>
    %cst_66 = arith.constant 0.000000e+00 : f32
    %185 = vector.broadcast %cst_66 : f32 to vector<8x128xf32>
    %186 = arith.select %5, %184, %185 : vector<8x128xi1>, vector<8x128xf32>
    %cst_67 = arith.constant dense<0.000000e+00> : vector<8xf32>
    %187 = vector.multi_reduction <add>, %186, %cst_67 [1] : vector<8x128xf32> to vector<8xf32>
    %188 = vector.shape_cast %187 : vector<8xf32> to vector<8x1xf32>
    %189 = math.log %188 : vector<8x1xf32>
    %190 = vector.broadcast %189 : vector<8x1xf32> to vector<8x128xf32>
    %191 = arith.subf %183, %190 : vector<8x128xf32>
    %192 = arith.index_cast %c6_i32 : i32 to index
    %c0_68 = arith.constant 0 : index
    %c0_69 = arith.constant 0 : index
    %193 = vector.load %arg6[%192, %c0_68, %c0_69] : memref<8x8x128xf32, #tpu.memory_space<vmem>>, vector<1x8x128xf32>
    %194 = vector.shape_cast %193 : vector<1x8x128xf32> to vector<8x128xf32>
    %195 = vector.shape_cast %191 : vector<8x128xf32> to vector<1x8x128xf32>
    tpu.vector_store %arg6[%192, %c0_68, %c0_69], %195 {strides = array<i32>} : memref<8x8x128xf32, #tpu.memory_space<vmem>>, vector<1x8x128xf32>,
    %c7_i32 = arith.constant 7 : i32
    %196 = arith.index_cast %c7_i32 : i32 to index
    %c0_70 = arith.constant 0 : index
    %c0_71 = arith.constant 0 : index
    %197 = vector.load %arg1[%196, %c0_70, %c0_71] : memref<8x8x256xf32, #tpu.memory_space<vmem>>, vector<1x8x256xf32>
    %198 = vector.shape_cast %197 : vector<1x8x256xf32> to vector<8x256xf32>
    %cst_72 = arith.constant dense<0.000000e+00> : vector<8x256xf32>
    %199 = tpu.matmul %174, %0, %cst_72 {dimension_numbers = #tpu.dot_dimension_numbers<[1], [0], [0], [1], [0, 0, 1, 1], [], []>} : vector<8x128xf32>, vector<128x256xf32>, vector<8x256xf32> -> vector<8x256xf32>
    %200 = arith.addf %198, %199 : vector<8x256xf32>
    %201 = vector.extract_strided_slice %200 {offsets = [0, 0], sizes = [8, 128], strides = [1, 1]} : vector<8x256xf32> to vector<8x128xf32>
    %cst_73 = arith.constant dense<0.000000e+00> : vector<8x128xf32>
    %202 = tpu.matmul %200, %1, %cst_73 {dimension_numbers = #tpu.dot_dimension_numbers<[1], [0], [0], [1], [0, 0, 1, 1], [], []>} : vector<8x256xf32>, vector<256x128xf32>, vector<8x128xf32> -> vector<8x128xf32>
    %203 = vector.broadcast %2 : vector<1x128xf32> to vector<8x128xf32>
    %204 = arith.addf %202, %203 : vector<8x128xf32>
    %205 = vector.broadcast %cst : f32 to vector<8x128xf32>
    %206 = arith.select %5, %204, %205 : vector<8x128xi1>, vector<8x128xf32>
    %cst_74 = arith.constant dense<0xFF800000> : vector<8xf32>
    %207 = vector.multi_reduction <maximumf>, %206, %cst_74 [1] : vector<8x128xf32> to vector<8xf32>
    %208 = vector.shape_cast %207 : vector<8xf32> to vector<8x1xf32>
    %209 = vector.broadcast %208 : vector<8x1xf32> to vector<8x128xf32>
    %210 = arith.subf %206, %209 : vector<8x128xf32>
    %211 = math.exp %210 : vector<8x128xf32>
    %cst_75 = arith.constant 0.000000e+00 : f32
    %212 = vector.broadcast %cst_75 : f32 to vector<8x128xf32>
    %213 = arith.select %5, %211, %212 : vector<8x128xi1>, vector<8x128xf32>
    %cst_76 = arith.constant dense<0.000000e+00> : vector<8xf32>
    %214 = vector.multi_reduction <add>, %213, %cst_76 [1] : vector<8x128xf32> to vector<8xf32>
    %215 = vector.shape_cast %214 : vector<8xf32> to vector<8x1xf32>
    %216 = math.log %215 : vector<8x1xf32>
    %217 = vector.broadcast %216 : vector<8x1xf32> to vector<8x128xf32>
    %218 = arith.subf %210, %217 : vector<8x128xf32>
    %219 = arith.index_cast %c7_i32 : i32 to index
    %c0_77 = arith.constant 0 : index
    %c0_78 = arith.constant 0 : index
    %220 = vector.load %arg6[%219, %c0_77, %c0_78] : memref<8x8x128xf32, #tpu.memory_space<vmem>>, vector<1x8x128xf32>
    %221 = vector.shape_cast %220 : vector<1x8x128xf32> to vector<8x128xf32>
    %222 = vector.shape_cast %218 : vector<8x128xf32> to vector<1x8x128xf32>
    tpu.vector_store %arg6[%219, %c0_77, %c0_78], %222 {strides = array<i32>} : memref<8x8x128xf32, #tpu.memory_space<vmem>>, vector<1x8x128xf32>,
    %c8_i32 = arith.constant 8 : i32
    %c0_79 = arith.constant 0 : index
    %c0_80 = arith.constant 0 : index
    %223 = vector.load %arg7[%c0_79, %c0_80] : memref<8x128xf32, #tpu.memory_space<vmem>>, vector<8x128xf32>
    tpu.vector_store %arg7[%c0_79, %c0_80], %201 {strides = array<i32>} : memref<8x128xf32, #tpu.memory_space<vmem>>, vector<8x128xf32>,
    return
  }
  func.func @transform_0(%arg0: i32) -> (i32, i32, i32) {
    %c0_i32 = arith.constant 0 : i32
    %c0_i32_0 = arith.constant 0 : i32
    %c0_i32_1 = arith.constant 0 : i32
    %c0_i32_2 = arith.constant 0 : i32
    return %c0_i32, %c0_i32_0, %c0_i32_1 : i32, i32, i32
  }
  func.func @transform_1(%arg0: i32) -> (i32, i32) {
    %c0_i32 = arith.constant 0 : i32
    %c0_i32_0 = arith.constant 0 : i32
    %c0_i32_1 = arith.constant 0 : i32
    return %c0_i32, %c0_i32_0 : i32, i32
  }
  func.func @transform_2(%arg0: i32) -> (i32, i32) {
    %c0_i32 = arith.constant 0 : i32
    %c0_i32_0 = arith.constant 0 : i32
    %c0_i32_1 = arith.constant 0 : i32
    return %c0_i32, %c0_i32_0 : i32, i32
  }
  func.func @transform_3(%arg0: i32) -> (i32, i32) {
    %c0_i32 = arith.constant 0 : i32
    %c0_i32_0 = arith.constant 0 : i32
    %c0_i32_1 = arith.constant 0 : i32
    return %c0_i32, %c0_i32_0 : i32, i32
  }
  func.func @transform_4(%arg0: i32) -> (i32, i32) {
    %c0_i32 = arith.constant 0 : i32
    %c0_i32_0 = arith.constant 0 : i32
    %c0_i32_1 = arith.constant 0 : i32
    return %c0_i32, %c0_i32_0 : i32, i32
  }
  func.func @transform_5(%arg0: i32) -> (i32, i32, i32) {
    %c0_i32 = arith.constant 0 : i32
    %c0_i32_0 = arith.constant 0 : i32
    %c0_i32_1 = arith.constant 0 : i32
    %c0_i32_2 = arith.constant 0 : i32
    return %c0_i32, %c0_i32_0, %c0_i32_1 : i32, i32, i32
  }
  func.func @transform_6(%arg0: i32) -> (i32, i32) {
    %c0_i32 = arith.constant 0 : i32
    %c0_i32_0 = arith.constant 0 : i32
    %c0_i32_1 = arith.constant 0 : i32
    return %c0_i32, %c0_i32_0 : i32, i32
  }
}

</mosaic_0001>

<llo_original>
// kernel: rnn_sequence_forward.1
$region0: #{rnn_sequence_forward.1}
  #allocation0 [shape = 'u32[]', space=smem, size = 0x4, offset = 0x4, fixed_abs, tag = 'smem constant byte address 0x4 - core index']
  #allocation1 [shape = 'u32[144,128]{1,0:T(1,128)}', space=vmem, size = 0x12000, scoped, tag = 'internal scratch']
  %s0 = inlined_call_operand.vmem [shape: f32[8,8,256], index: 0, kind: input, shape index: {}]
  %s1 = inlined_call_operand.vmem [shape: f32[8,128], index: 1, kind: input, shape index: {}]
  %s2 = inlined_call_operand.vmem [shape: f32[128,256], index: 2, kind: input, shape index: {}]
  %s3 = inlined_call_operand.vmem [shape: f32[256,128], index: 3, kind: input, shape index: {}]
  %s4 = inlined_call_operand.vmem [shape: f32[1,128], index: 4, kind: input, shape index: {}]
  %s5 = inlined_call_operand.vmem [shape: f32[8,8,128], index: 5, kind: output, shape index: {0}]
  %s6 = inlined_call_operand.vmem [shape: f32[8,128], index: 6, kind: output, shape index: {1}]
  %7 = xla_tuple %s5, %s6
  %s8 = sld [smem:[#allocation0]]
  $region38: #{rnn_sequence_forward.1} parent=0
    _
  %s10 = ssub.s32 1, %s8
  %s11 = scalar_select 0, %s10, %s8
  // Predicated region
  $region2: #{rnn_sequence_forward.1} parent=0 // pred_check
    _
  $region3: #{rnn_sequence_forward.1} parent=0 // pred_check_branch
    %13 = sbr.rel (0) target = $region5
  $region4: #{rnn_sequence_forward.1} parent=0 // pred_region
    _
  $region5: #{rnn_sequence_forward.1} parent=0 // pred_fallthru
    _
  // Predicated region
  $region6: #{rnn_sequence_forward.1} parent=0 // pred_check
    _
  $region7: #{rnn_sequence_forward.1} parent=0 // pred_check_branch
    %15 = sbr.rel (0) target = $region9
  $region8: #{rnn_sequence_forward.1} parent=0 // pred_region
    _
  $region9: #{rnn_sequence_forward.1} parent=0 // pred_fallthru
    _
  // Predicated region
  $region10: #{rnn_sequence_forward.1} parent=0 // pred_check
    _
  $region11: #{rnn_sequence_forward.1} parent=0 // pred_check_branch
    %17 = sbr.rel (0) target = $region13
  $region12: #{rnn_sequence_forward.1} parent=0 // pred_region
    _
  $region13: #{rnn_sequence_forward.1} parent=0 // pred_fallthru
    _
  // Predicated region
  $region14: #{rnn_sequence_forward.1} parent=0 // pred_check
    _
  $region15: #{rnn_sequence_forward.1} parent=0 // pred_check_branch
    %19 = sbr.rel (0) target = $region17
  $region16: #{rnn_sequence_forward.1} parent=0 // pred_region
    _
  $region17: #{rnn_sequence_forward.1} parent=0 // pred_fallthru
    _
  // Predicated region
  $region18: #{rnn_sequence_forward.1} parent=0 // pred_check
    _
  $region19: #{rnn_sequence_forward.1} parent=0 // pred_check_branch
    %21 = sbr.rel (0) target = $region21
  $region20: #{rnn_sequence_forward.1} parent=0 // pred_region
    _
  $region21: #{rnn_sequence_forward.1} parent=0 // pred_fallthru
    _
  %v22 = vld [vmem:[%s2] sm:$0xff]
  %v23 = vld [vmem:[%s2 + $0x8] sm:$0xff]
  %v24 = vld [vmem:[%s2 + $0x10] sm:$0xff]
  %v25 = vld [vmem:[%s2 + $0x18] sm:$0xff]
  %v26 = vld [vmem:[%s2 + $0x20] sm:$0xff]
  %v27 = vld [vmem:[%s2 + $0x28] sm:$0xff]
  %v28 = vld [vmem:[%s2 + $0x30] sm:$0xff]
  %v29 = vld [vmem:[%s2 + $0x38] sm:$0xff]
  %v30 = vld [vmem:[%s2 + $0x40] sm:$0xff]
  %v31 = vld [vmem:[%s2 + $0x48] sm:$0xff]
  %v32 = vld [vmem:[%s2 + $0x50] sm:$0xff]
  %v33 = vld [vmem:[%s2 + $0x58] sm:$0xff]
  %v34 = vld [vmem:[%s2 + $0x60] sm:$0xff]
  %v35 = vld [vmem:[%s2 + $0x68] sm:$0xff]
  %v36 = vld [vmem:[%s2 + $0x70] sm:$0xff]
  %v37 = vld [vmem:[%s2 + $0x78] sm:$0xff]
  %v38 = vld [vmem:[%s2 + $0x80] sm:$0xff]
  %v39 = vld [vmem:[%s2 + $0x88] sm:$0xff]
  %v40 = vld [vmem:[%s2 + $0x90] sm:$0xff]
  %v41 = vld [vmem:[%s2 + $0x98] sm:$0xff]
  %v42 = vld [vmem:[%s2 + $0xa0] sm:$0xff]
  %v43 = vld [vmem:[%s2 + $0xa8] sm:$0xff]
  %v44 = vld [vmem:[%s2 + $0xb0] sm:$0xff]
  %v45 = vld [vmem:[%s2 + $0xb8] sm:$0xff]
  %v46 = vld [vmem:[%s2 + $0xc0] sm:$0xff]
  %v47 = vld [vmem:[%s2 + $0xc8] sm:$0xff]
  %v48 = vld [vmem:[%s2 + $0xd0] sm:$0xff]
  %v49 = vld [vmem:[%s2 + $0xd8] sm:$0xff]
  %v50 = vld [vmem:[%s2 + $0xe0] sm:$0xff]
  %v51 = vld [vmem:[%s2 + $0xe8] sm:$0xff]
  %v52 = vld [vmem:[%s2 + $0xf0] sm:$0xff]
  %v53 = vld [vmem:[%s2 + $0xf8] sm:$0xff]
  %v54 = vld [vmem:[%s3] sm:$0xff]
  %v55 = vld [vmem:[%s3 + $0x8] sm:$0xff]
  %v56 = vld [vmem:[%s3 + $0x10] sm:$0xff]
  %v57 = vld [vmem:[%s3 + $0x18] sm:$0xff]
  %v58 = vld [vmem:[%s3 + $0x20] sm:$0xff]
  %v59 = vld [vmem:[%s3 + $0x28] sm:$0xff]
  %v60 = vld [vmem:[%s3 + $0x30] sm:$0xff]
  %v61 = vld [vmem:[%s3 + $0x38] sm:$0xff]
  %v62 = vld [vmem:[%s3 + $0x40] sm:$0xff]
  %v63 = vld [vmem:[%s3 + $0x48] sm:$0xff]
  %v64 = vld [vmem:[%s3 + $0x50] sm:$0xff]
  %v65 = vld [vmem:[%s3 + $0x58] sm:$0xff]
  %v66 = vld [vmem:[%s3 + $0x60] sm:$0xff]
  %v67 = vld [vmem:[%s3 + $0x68] sm:$0xff]
  %v68 = vld [vmem:[%s3 + $0x70] sm:$0xff]
  %v69 = vld [vmem:[%s3 + $0x78] sm:$0xff]
  %v70 = vld [vmem:[%s3 + $0x80] sm:$0xff]
  %v71 = vld [vmem:[%s3 + $0x88] sm:$0xff]
  %v72 = vld [vmem:[%s3 + $0x90] sm:$0xff]
  %v73 = vld [vmem:[%s3 + $0x98] sm:$0xff]
  %v74 = vld [vmem:[%s3 + $0xa0] sm:$0xff]
  %v75 = vld [vmem:[%s3 + $0xa8] sm:$0xff]
  %v76 = vld [vmem:[%s3 + $0xb0] sm:$0xff]
  %v77 = vld [vmem:[%s3 + $0xb8] sm:$0xff]
  %v78 = vld [vmem:[%s3 + $0xc0] sm:$0xff]
  %v79 = vld [vmem:[%s3 + $0xc8] sm:$0xff]
  %v80 = vld [vmem:[%s3 + $0xd0] sm:$0xff]
  %v81 = vld [vmem:[%s3 + $0xd8] sm:$0xff]
  %v82 = vld [vmem:[%s3 + $0xe0] sm:$0xff]
  %v83 = vld [vmem:[%s3 + $0xe8] sm:$0xff]
  %v84 = vld [vmem:[%s3 + $0xf0] sm:$0xff]
  %v85 = vld [vmem:[%s3 + $0xf8] sm:$0xff]
  %v86 = vld [vmem:[%s4] sm:$0x1]
  %v87 = vlaneseq
  %v88 = vand.u32 %v87, 127
  %vm89 = vcmp.lt.s32.totalorder %v88, 16
  %v90 = vld [vmem:[%s1] sm:$0xff]
  %v91 = vld [vmem:[%s0] sm:$0xff]
  %v92 = vld [vmem:[%s0 + $0x8] sm:$0xff]
  %93 = vmatprep.subr.mxu0 %v53
  %94 = vmatpush1.msra.mxu0 %v52
  %95 = vmatprep.subr.mxu0 %v51
  %96 = vmatpush1.msra.mxu0 %v50
  %97 = vmatprep.subr.mxu0 %v49
  %98 = vmatpush1.msra.mxu0 %v48
  %99 = vmatprep.subr.mxu0 %v47
  %100 = vmatpush1.msra.mxu0 %v46
  %101 = vmatprep.subr.mxu0 %v45
  %102 = vmatpush1.msra.mxu0 %v44
  %103 = vmatprep.subr.mxu0 %v43
  %104 = vmatpush1.msra.mxu0 %v42
  %105 = vmatprep.subr.mxu0 %v41
  %106 = vmatpush1.msra.mxu0 %v40
  %107 = vmatprep.subr.mxu0 %v39
  %108 = vmatpush1.msra.mxu0 %v38
  %109 = vmatprep.subr.mxu0 %v37
  %110 = vmatpush1.msra.mxu0 %v36
  %111 = vmatprep.subr.mxu0 %v35
  %112 = vmatpush1.msra.mxu0 %v34
  %113 = vmatprep.subr.mxu0 %v33
  %114 = vmatpush1.msra.mxu0 %v32
  %115 = vmatprep.subr.mxu0 %v31
  %116 = vmatpush1.msra.mxu0 %v30
  %117 = vmatprep.subr.mxu0 %v29
  %118 = vmatpush1.msra.mxu0 %v28
  %119 = vmatprep.subr.mxu0 %v27
  %120 = vmatpush1.msra.mxu0 %v26
  %121 = vmatprep.subr.mxu0 %v25
  %122 = vmatpush1.msra.mxu0 %v24
  %123 = vmatprep.subr.mxu0 %v23
  %124 = vmatpush1.msra.mxu0 %v22
  %125 = vmatprep.subr.mxu0 0.0
  %126 = vmatpush2.msra.mxu0 0.0
  %127 = vmatprep.subr.mxu0 0.0
  %128 = vmatpush2.msra.mxu0 0.0
  %129 = vmatprep.subr.mxu0 0.0
  %130 = vmatpush2.msra.mxu0 0.0
  %131 = vmatprep.subr.mxu0 0.0
  %132 = vmatpush2.msra.mxu0 0.0
  %133 = vmatprep.subr.mxu0 0.0
  %134 = vmatpush2.msra.mxu0 0.0
  %135 = vmatprep.subr.mxu0 0.0
  %136 = vmatpush2.msra.mxu0 0.0
  %137 = vmatprep.subr.mxu0 0.0
  %138 = vmatpush2.msra.mxu0 0.0
  %139 = vmatprep.subr.mxu0 0.0
  %140 = vmatpush2.msra.mxu0 0.0
  %141 = vmatprep.subr.mxu0 0.0
  %142 = vmatpush2.msra.mxu0 0.0
  %143 = vmatprep.subr.mxu0 0.0
  %144 = vmatpush2.msra.mxu0 0.0
  %145 = vmatprep.subr.mxu0 0.0
  %146 = vmatpush2.msra.mxu0 0.0
  %147 = vmatprep.subr.mxu0 0.0
  %148 = vmatpush2.msra.mxu0 0.0
  %149 = vmatprep.subr.mxu0 0.0
  %150 = vmatpush2.msra.mxu0 0.0
  %151 = vmatprep.subr.mxu0 0.0
  %152 = vmatpush2.msra.mxu0 0.0
  %153 = vmatprep.subr.mxu0 0.0
  %154 = vmatpush2.msra.mxu0 0.0
  %155 = vmatprep.subr.mxu0 0.0
  %156 = vmatpush2.msra.mxu0 0.0
  %157 = vmatprep.mubr.f32.mxu0 0.0
  %158 = vmatmul.mubr.f32.gmra.mxu0 %v90
  %v159 = vpop.f32.mrf.mxu0
  %v160 = vadd.f32 0.0, %v159
  %v161 = vpop.f32.mrf.mxu0
  %v162 = vadd.f32 0.0, %v161
  %163 = vdwg.mxu0
  %v164 = vadd.f32 %v91, %v160
  %v165 = vadd.f32 %v92, %v162
  %v167 = vlaneseq
  %v168 = vshrl.u32 %v167, 7
  %v169 = vsub.s32 0, %v168
  %v170 = vrot.slane %v86, %v169
  %172 = vmatprep.subr.mxu0 0.0
  %173 = vmatpush1.msra.mxu0 %v69
  %174 = vmatprep.subr.mxu0 0.0
  %175 = vmatpush1.msra.mxu0 %v68
  %176 = vmatprep.subr.mxu0 0.0
  %177 = vmatpush1.msra.mxu0 %v67
  %178 = vmatprep.subr.mxu0 0.0
  %179 = vmatpush1.msra.mxu0 %v66
  %180 = vmatprep.subr.mxu0 0.0
  %181 = vmatpush1.msra.mxu0 %v65
  %182 = vmatprep.subr.mxu0 0.0
  %183 = vmatpush1.msra.mxu0 %v64
  %184 = vmatprep.subr.mxu0 0.0
  %185 = vmatpush1.msra.mxu0 %v63
  %186 = vmatprep.subr.mxu0 0.0
  %187 = vmatpush1.msra.mxu0 %v62
  %188 = vmatprep.subr.mxu0 0.0
  %189 = vmatpush1.msra.mxu0 %v61
  %190 = vmatprep.subr.mxu0 0.0
  %191 = vmatpush1.msra.mxu0 %v60
  %192 = vmatprep.subr.mxu0 0.0
  %193 = vmatpush1.msra.mxu0 %v59
  %194 = vmatprep.subr.mxu0 0.0
  %195 = vmatpush1.msra.mxu0 %v58
  %196 = vmatprep.subr.mxu0 0.0
  %197 = vmatpush1.msra.mxu0 %v57
  %198 = vmatprep.subr.mxu0 0.0
  %199 = vmatpush1.msra.mxu0 %v56
  %200 = vmatprep.subr.mxu0 0.0
  %201 = vmatpush1.msra.mxu0 %v55
  %202 = vmatprep.subr.mxu0 0.0
  %203 = vmatpush1.msra.mxu0 %v54
  %204 = vmatprep.subr.mxu0 0.0
  %205 = vmatpush2.msra.mxu0 %v85
  %206 = vmatprep.subr.mxu0 0.0
  %207 = vmatpush2.msra.mxu0 %v84
  %208 = vmatprep.subr.mxu0 0.0
  %209 = vmatpush2.msra.mxu0 %v83
  %210 = vmatprep.subr.mxu0 0.0
  %211 = vmatpush2.msra.mxu0 %v82
  %212 = vmatprep.subr.mxu0 0.0
  %213 = vmatpush2.msra.mxu0 %v81
  %214 = vmatprep.subr.mxu0 0.0
  %215 = vmatpush2.msra.mxu0 %v80
  %216 = vmatprep.subr.mxu0 0.0
  %217 = vmatpush2.msra.mxu0 %v79
  %218 = vmatprep.subr.mxu0 0.0
  %219 = vmatpush2.msra.mxu0 %v78
  %220 = vmatprep.subr.mxu0 0.0
  %221 = vmatpush2.msra.mxu0 %v77
  %222 = vmatprep.subr.mxu0 0.0
  %223 = vmatpush2.msra.mxu0 %v76
  %224 = vmatprep.subr.mxu0 0.0
  %225 = vmatpush2.msra.mxu0 %v75
  %226 = vmatprep.subr.mxu0 0.0
  %227 = vmatpush2.msra.mxu0 %v74
  %228 = vmatprep.subr.mxu0 0.0
  %229 = vmatpush2.msra.mxu0 %v73
  %230 = vmatprep.subr.mxu0 0.0
  %231 = vmatpush2.msra.mxu0 %v72
  %232 = vmatprep.subr.mxu0 0.0
  %233 = vmatpush2.msra.mxu0 %v71
  %234 = vmatprep.subr.mxu0 0.0
  %235 = vmatpush2.msra.mxu0 %v70
  %236 = vmatprep.mubr.f32.mxu0 %v165
  %237 = vmatmul.mubr.f32.gmra.mxu0 %v164
  %v238 = vpop.f32.mrf.mxu0
  %v239 = vadd.f32 %v170, %v238
  %v240 = vpop.f32.mrf.mxu0
  %241 = vdwg.mxu0
  %v242 = vsel %vm89, %v239, -1e+30
  %243 = vmax.xlane.f32.xlu0 %v242
  %v244 = vpop.xlane.xlu0 %243
  %v245 = vsub.f32 %v242, %v244
  %v246 = vmul.f32 %v245, 1.442695
  %v247 = vpow.pop %v246
  %v248 = vsel %vm89, %v247, 0.0
  %249 = vadd.xlane.f32.xlu0 %v248
  %v250 = vpop.xlane.xlu0 %249
  %v251 = vlog2.pop %v250
  %v252 = vmul.f32 %v251, 0.6931472
  %v253 = vsub.f32 %v245, %v252
  %254 = vst [vmem:[%s5] sm:$0xff] %v253
  %s255 = scalar_lea.vmem %s0, 16
  %v256 = vld [vmem:[%s255] sm:$0xff]
  %v257 = vld [vmem:[%s255 + $0x8] sm:$0xff]
  %258 = vmatprep.subr.mxu0 %v53
  %259 = vmatpush1.msra.mxu0 %v52
  %260 = vmatprep.subr.mxu0 %v51
  %261 = vmatpush1.msra.mxu0 %v50
  %262 = vmatprep.subr.mxu0 %v49
  %263 = vmatpush1.msra.mxu0 %v48
  %264 = vmatprep.subr.mxu0 %v47
  %265 = vmatpush1.msra.mxu0 %v46
  %266 = vmatprep.subr.mxu0 %v45
  %267 = vmatpush1.msra.mxu0 %v44
  %268 = vmatprep.subr.mxu0 %v43
  %269 = vmatpush1.msra.mxu0 %v42
  %270 = vmatprep.subr.mxu0 %v41
  %271 = vmatpush1.msra.mxu0 %v40
  %272 = vmatprep.subr.mxu0 %v39
  %273 = vmatpush1.msra.mxu0 %v38
  %274 = vmatprep.subr.mxu0 %v37
  %275 = vmatpush1.msra.mxu0 %v36
  %276 = vmatprep.subr.mxu0 %v35
  %277 = vmatpush1.msra.mxu0 %v34
  %278 = vmatprep.subr.mxu0 %v33
  %279 = vmatpush1.msra.mxu0 %v32
  %280 = vmatprep.subr.mxu0 %v31
  %281 = vmatpush1.msra.mxu0 %v30
  %282 = vmatprep.subr.mxu0 %v29
  %283 = vmatpush1.msra.mxu0 %v28
  %284 = vmatprep.subr.mxu0 %v27
  %285 = vmatpush1.msra.mxu0 %v26
  %286 = vmatprep.subr.mxu0 %v25
  %287 = vmatpush1.msra.mxu0 %v24
  %288 = vmatprep.subr.mxu0 %v23
  %289 = vmatpush1.msra.mxu0 %v22
  %290 = vmatprep.subr.mxu0 0.0
  %291 = vmatpush2.msra.mxu0 0.0
  %292 = vmatprep.subr.mxu0 0.0
  %293 = vmatpush2.msra.mxu0 0.0
  %294 = vmatprep.subr.mxu0 0.0
  %295 = vmatpush2.msra.mxu0 0.0
  %296 = vmatprep.subr.mxu0 0.0
  %297 = vmatpush2.msra.mxu0 0.0
  %298 = vmatprep.subr.mxu0 0.0
  %299 = vmatpush2.msra.mxu0 0.0
  %300 = vmatprep.subr.mxu0 0.0
  %301 = vmatpush2.msra.mxu0 0.0
  %302 = vmatprep.subr.mxu0 0.0
  %303 = vmatpush2.msra.mxu0 0.0
  %304 = vmatprep.subr.mxu0 0.0
  %305 = vmatpush2.msra.mxu0 0.0
  %306 = vmatprep.subr.mxu0 0.0
  %307 = vmatpush2.msra.mxu0 0.0
  %308 = vmatprep.subr.mxu0 0.0
  %309 = vmatpush2.msra.mxu0 0.0
  %310 = vmatprep.subr.mxu0 0.0
  %311 = vmatpush2.msra.mxu0 0.0
  %312 = vmatprep.subr.mxu0 0.0
  %313 = vmatpush2.msra.mxu0 0.0
  %314 = vmatprep.subr.mxu0 0.0
  %315 = vmatpush2.msra.mxu0 0.0
  %316 = vmatprep.subr.mxu0 0.0
  %317 = vmatpush2.msra.mxu0 0.0
  %318 = vmatprep.subr.mxu0 0.0
  %319 = vmatpush2.msra.mxu0 0.0
  %320 = vmatprep.subr.mxu0 0.0
  %321 = vmatpush2.msra.mxu0 0.0
  %322 = vmatprep.mubr.f32.mxu0 0.0
  %323 = vmatmul.mubr.f32.gmra.mxu0 %v164
  %v324 = vpop.f32.mrf.mxu0
  %v325 = vadd.f32 0.0, %v324
  %v326 = vpop.f32.mrf.mxu0
  %v327 = vadd.f32 0.0, %v326
  %328 = vdwg.mxu0
  %v329 = vadd.f32 %v256, %v325
  %v330 = vadd.f32 %v257, %v327
  %331 = vmatprep.subr.mxu0 0.0
  %332 = vmatpush1.msra.mxu0 %v69
  %333 = vmatprep.subr.mxu0 0.0
  %334 = vmatpush1.msra.mxu0 %v68
  %335 = vmatprep.subr.mxu0 0.0
  %336 = vmatpush1.msra.mxu0 %v67
  %337 = vmatprep.subr.mxu0 0.0
  %338 = vmatpush1.msra.mxu0 %v66
  %339 = vmatprep.subr.mxu0 0.0
  %340 = vmatpush1.msra.mxu0 %v65
  %341 = vmatprep.subr.mxu0 0.0
  %342 = vmatpush1.msra.mxu0 %v64
  %343 = vmatprep.subr.mxu0 0.0
  %344 = vmatpush1.msra.mxu0 %v63
  %345 = vmatprep.subr.mxu0 0.0
  %346 = vmatpush1.msra.mxu0 %v62
  %347 = vmatprep.subr.mxu0 0.0
  %348 = vmatpush1.msra.mxu0 %v61
  %349 = vmatprep.subr.mxu0 0.0
  %350 = vmatpush1.msra.mxu0 %v60
  %351 = vmatprep.subr.mxu0 0.0
  %352 = vmatpush1.msra.mxu0 %v59
  %353 = vmatprep.subr.mxu0 0.0
  %354 = vmatpush1.msra.mxu0 %v58
  %355 = vmatprep.subr.mxu0 0.0
  %356 = vmatpush1.msra.mxu0 %v57
  %357 = vmatprep.subr.mxu0 0.0
  %358 = vmatpush1.msra.mxu0 %v56
  %359 = vmatprep.subr.mxu0 0.0
  %360 = vmatpush1.msra.mxu0 %v55
  %361 = vmatprep.subr.mxu0 0.0
  %362 = vmatpush1.msra.mxu0 %v54
  %363 = vmatprep.subr.mxu0 0.0
  %364 = vmatpush2.msra.mxu0 %v85
  %365 = vmatprep.subr.mxu0 0.0
  %366 = vmatpush2.msra.mxu0 %v84
  %367 = vmatprep.subr.mxu0 0.0
  %368 = vmatpush2.msra.mxu0 %v83
  %369 = vmatprep.subr.mxu0 0.0
  %370 = vmatpush2.msra.mxu0 %v82
  %371 = vmatprep.subr.mxu0 0.0
  %372 = vmatpush2.msra.mxu0 %v81
  %373 = vmatprep.subr.mxu0 0.0
  %374 = vmatpush2.msra.mxu0 %v80
  %375 = vmatprep.subr.mxu0 0.0
  %376 = vmatpush2.msra.mxu0 %v79
  %377 = vmatprep.subr.mxu0 0.0
  %378 = vmatpush2.msra.mxu0 %v78
  %379 = vmatprep.subr.mxu0 0.0
  %380 = vmatpush2.msra.mxu0 %v77
  %381 = vmatprep.subr.mxu0 0.0
  %382 = vmatpush2.msra.mxu0 %v76
  %383 = vmatprep.subr.mxu0 0.0
  %384 = vmatpush2.msra.mxu0 %v75
  %385 = vmatprep.subr.mxu0 0.0
  %386 = vmatpush2.msra.mxu0 %v74
  %387 = vmatprep.subr.mxu0 0.0
  %388 = vmatpush2.msra.mxu0 %v73
  %389 = vmatprep.subr.mxu0 0.0
  %390 = vmatpush2.msra.mxu0 %v72
  %391 = vmatprep.subr.mxu0 0.0
  %392 = vmatpush2.msra.mxu0 %v71
  %393 = vmatprep.subr.mxu0 0.0
  %394 = vmatpush2.msra.mxu0 %v70
  %395 = vmatprep.mubr.f32.mxu0 %v330
  %396 = vmatmul.mubr.f32.gmra.mxu0 %v329
  %v397 = vpop.f32.mrf.mxu0
  %v398 = vadd.f32 %v170, %v397
  %v399 = vpop.f32.mrf.mxu0
  %400 = vdwg.mxu0
  %v401 = vsel %vm89, %v398, -1e+30
  %402 = vmax.xlane.f32.xlu0 %v401
  %v403 = vpop.xlane.xlu0 %402
  %v404 = vsub.f32 %v401, %v403
  %v405 = vmul.f32 %v404, 1.442695
  %v406 = vpow.pop %v405
  %v407 = vsel %vm89, %v406, 0.0
  %408 = vadd.xlane.f32.xlu0 %v407
  %v409 = vpop.xlane.xlu0 %408
  %v410 = vlog2.pop %v409
  %v411 = vmul.f32 %v410, 0.6931472
  %v412 = vsub.f32 %v404, %v411
  %s413 = scalar_lea.vmem %s5, 8
  %414 = vst [vmem:[%s413] sm:$0xff] %v412
  %s415 = scalar_lea.vmem %s0, 32
  %v416 = vld [vmem:[%s415] sm:$0xff]
  %v417 = vld [vmem:[%s415 + $0x8] sm:$0xff]
  %418 = vmatprep.subr.mxu0 %v53
  %419 = vmatpush1.msra.mxu0 %v52
  %420 = vmatprep.subr.mxu0 %v51
  %421 = vmatpush1.msra.mxu0 %v50
  %422 = vmatprep.subr.mxu0 %v49
  %423 = vmatpush1.msra.mxu0 %v48
  %424 = vmatprep.subr.mxu0 %v47
  %425 = vmatpush1.msra.mxu0 %v46
  %426 = vmatprep.subr.mxu0 %v45
  %427 = vmatpush1.msra.mxu0 %v44
  %428 = vmatprep.subr.mxu0 %v43
  %429 = vmatpush1.msra.mxu0 %v42
  %430 = vmatprep.subr.mxu0 %v41
  %431 = vmatpush1.msra.mxu0 %v40
  %432 = vmatprep.subr.mxu0 %v39
  %433 = vmatpush1.msra.mxu0 %v38
  %434 = vmatprep.subr.mxu0 %v37
  %435 = vmatpush1.msra.mxu0 %v36
  %436 = vmatprep.subr.mxu0 %v35
  %437 = vmatpush1.msra.mxu0 %v34
  %438 = vmatprep.subr.mxu0 %v33
  %439 = vmatpush1.msra.mxu0 %v32
  %440 = vmatprep.subr.mxu0 %v31
  %441 = vmatpush1.msra.mxu0 %v30
  %442 = vmatprep.subr.mxu0 %v29
  %443 = vmatpush1.msra.mxu0 %v28
  %444 = vmatprep.subr.mxu0 %v27
  %445 = vmatpush1.msra.mxu0 %v26
  %446 = vmatprep.subr.mxu0 %v25
  %447 = vmatpush1.msra.mxu0 %v24
  %448 = vmatprep.subr.mxu0 %v23
  %449 = vmatpush1.msra.mxu0 %v22
  %450 = vmatprep.subr.mxu0 0.0
  %451 = vmatpush2.msra.mxu0 0.0
  %452 = vmatprep.subr.mxu0 0.0
  %453 = vmatpush2.msra.mxu0 0.0
  %454 = vmatprep.subr.mxu0 0.0
  %455 = vmatpush2.msra.mxu0 0.0
  %456 = vmatprep.subr.mxu0 0.0
  %457 = vmatpush2.msra.mxu0 0.0
  %458 = vmatprep.subr.mxu0 0.0
  %459 = vmatpush2.msra.mxu0 0.0
  %460 = vmatprep.subr.mxu0 0.0
  %461 = vmatpush2.msra.mxu0 0.0
  %462 = vmatprep.subr.mxu0 0.0
  %463 = vmatpush2.msra.mxu0 0.0
  %464 = vmatprep.subr.mxu0 0.0
  %465 = vmatpush2.msra.mxu0 0.0
  %466 = vmatprep.subr.mxu0 0.0
  %467 = vmatpush2.msra.mxu0 0.0
  %468 = vmatprep.subr.mxu0 0.0
  %469 = vmatpush2.msra.mxu0 0.0
  %470 = vmatprep.subr.mxu0 0.0
  %471 = vmatpush2.msra.mxu0 0.0
  %472 = vmatprep.subr.mxu0 0.0
  %473 = vmatpush2.msra.mxu0 0.0
  %474 = vmatprep.subr.mxu0 0.0
  %475 = vmatpush2.msra.mxu0 0.0
  %476 = vmatprep.subr.mxu0 0.0
  %477 = vmatpush2.msra.mxu0 0.0
  %478 = vmatprep.subr.mxu0 0.0
  %479 = vmatpush2.msra.mxu0 0.0
  %480 = vmatprep.subr.mxu0 0.0
  %481 = vmatpush2.msra.mxu0 0.0
  %482 = vmatprep.mubr.f32.mxu0 0.0
  %483 = vmatmul.mubr.f32.gmra.mxu0 %v329
  %v484 = vpop.f32.mrf.mxu0
  %v485 = vadd.f32 0.0, %v484
  %v486 = vpop.f32.mrf.mxu0
  %v487 = vadd.f32 0.0, %v486
  %488 = vdwg.mxu0
  %v489 = vadd.f32 %v416, %v485
  %v490 = vadd.f32 %v417, %v487
  %491 = vmatprep.subr.mxu0 0.0
  %492 = vmatpush1.msra.mxu0 %v69
  %493 = vmatprep.subr.mxu0 0.0
  %494 = vmatpush1.msra.mxu0 %v68
  %495 = vmatprep.subr.mxu0 0.0
  %496 = vmatpush1.msra.mxu0 %v67
  %497 = vmatprep.subr.mxu0 0.0
  %498 = vmatpush1.msra.mxu0 %v66
  %499 = vmatprep.subr.mxu0 0.0
  %500 = vmatpush1.msra.mxu0 %v65
  %501 = vmatprep.subr.mxu0 0.0
  %502 = vmatpush1.msra.mxu0 %v64
  %503 = vmatprep.subr.mxu0 0.0
  %504 = vmatpush1.msra.mxu0 %v63
  %505 = vmatprep.subr.mxu0 0.0
  %506 = vmatpush1.msra.mxu0 %v62
  %507 = vmatprep.subr.mxu0 0.0
  %508 = vmatpush1.msra.mxu0 %v61
  %509 = vmatprep.subr.mxu0 0.0
  %510 = vmatpush1.msra.mxu0 %v60
  %511 = vmatprep.subr.mxu0 0.0
  %512 = vmatpush1.msra.mxu0 %v59
  %513 = vmatprep.subr.mxu0 0.0
  %514 = vmatpush1.msra.mxu0 %v58
  %515 = vmatprep.subr.mxu0 0.0
  %516 = vmatpush1.msra.mxu0 %v57
  %517 = vmatprep.subr.mxu0 0.0
  %518 = vmatpush1.msra.mxu0 %v56
  %519 = vmatprep.subr.mxu0 0.0
  %520 = vmatpush1.msra.mxu0 %v55
  %521 = vmatprep.subr.mxu0 0.0
  %522 = vmatpush1.msra.mxu0 %v54
  %523 = vmatprep.subr.mxu0 0.0
  %524 = vmatpush2.msra.mxu0 %v85
  %525 = vmatprep.subr.mxu0 0.0
  %526 = vmatpush2.msra.mxu0 %v84
  %527 = vmatprep.subr.mxu0 0.0
  %528 = vmatpush2.msra.mxu0 %v83
  %529 = vmatprep.subr.mxu0 0.0
  %530 = vmatpush2.msra.mxu0 %v82
  %531 = vmatprep.subr.mxu0 0.0
  %532 = vmatpush2.msra.mxu0 %v81
  %533 = vmatprep.subr.mxu0 0.0
  %534 = vmatpush2.msra.mxu0 %v80
  %535 = vmatprep.subr.mxu0 0.0
  %536 = vmatpush2.msra.mxu0 %v79
  %537 = vmatprep.subr.mxu0 0.0
  %538 = vmatpush2.msra.mxu0 %v78
  %539 = vmatprep.subr.mxu0 0.0
  %540 = vmatpush2.msra.mxu0 %v77
  %541 = vmatprep.subr.mxu0 0.0
  %542 = vmatpush2.msra.mxu0 %v76
  %543 = vmatprep.subr.mxu0 0.0
  %544 = vmatpush2.msra.mxu0 %v75
  %545 = vmatprep.subr.mxu0 0.0
  %546 = vmatpush2.msra.mxu0 %v74
  %547 = vmatprep.subr.mxu0 0.0
  %548 = vmatpush2.msra.mxu0 %v73
  %549 = vmatprep.subr.mxu0 0.0
  %550 = vmatpush2.msra.mxu0 %v72
  %551 = vmatprep.subr.mxu0 0.0
  %552 = vmatpush2.msra.mxu0 %v71
  %553 = vmatprep.subr.mxu0 0.0
  %554 = vmatpush2.msra.mxu0 %v70
  %555 = vmatprep.mubr.f32.mxu0 %v490
  %556 = vmatmul.mubr.f32.gmra.mxu0 %v489
  %v557 = vpop.f32.mrf.mxu0
  %v558 = vadd.f32 %v170, %v557
  %v559 = vpop.f32.mrf.mxu0
  %560 = vdwg.mxu0
  %v561 = vsel %vm89, %v558, -1e+30
  %562 = vmax.xlane.f32.xlu0 %v561
  %v563 = vpop.xlane.xlu0 %562
  %v564 = vsub.f32 %v561, %v563
  %v565 = vmul.f32 %v564, 1.442695
  %v566 = vpow.pop %v565
  %v567 = vsel %vm89, %v566, 0.0
  %568 = vadd.xlane.f32.xlu0 %v567
  %v569 = vpop.xlane.xlu0 %568
  %v570 = vlog2.pop %v569
  %v571 = vmul.f32 %v570, 0.6931472
  %v572 = vsub.f32 %v564, %v571
  %s573 = scalar_lea.vmem %s5, 16
  %574 = vst [vmem:[%s573] sm:$0xff] %v572
  %s575 = scalar_lea.vmem %s0, 48
  %v576 = vld [vmem:[%s575] sm:$0xff]
  %v577 = vld [vmem:[%s575 + $0x8] sm:$0xff]
  %578 = vmatprep.subr.mxu0 %v53
  %579 = vmatpush1.msra.mxu0 %v52
  %580 = vmatprep.subr.mxu0 %v51
  %581 = vmatpush1.msra.mxu0 %v50
  %582 = vmatprep.subr.mxu0 %v49
  %583 = vmatpush1.msra.mxu0 %v48
  %584 = vmatprep.subr.mxu0 %v47
  %585 = vmatpush1.msra.mxu0 %v46
  %586 = vmatprep.subr.mxu0 %v45
  %587 = vmatpush1.msra.mxu0 %v44
  %588 = vmatprep.subr.mxu0 %v43
  %589 = vmatpush1.msra.mxu0 %v42
  %590 = vmatprep.subr.mxu0 %v41
  %591 = vmatpush1.msra.mxu0 %v40
  %592 = vmatprep.subr.mxu0 %v39
  %593 = vmatpush1.msra.mxu0 %v38
  %594 = vmatprep.subr.mxu0 %v37
  %595 = vmatpush1.msra.mxu0 %v36
  %596 = vmatprep.subr.mxu0 %v35
  %597 = vmatpush1.msra.mxu0 %v34
  %598 = vmatprep.subr.mxu0 %v33
  %599 = vmatpush1.msra.mxu0 %v32
  %600 = vmatprep.subr.mxu0 %v31
  %601 = vmatpush1.msra.mxu0 %v30
  %602 = vmatprep.subr.mxu0 %v29
  %603 = vmatpush1.msra.mxu0 %v28
  %604 = vmatprep.subr.mxu0 %v27
  %605 = vmatpush1.msra.mxu0 %v26
  %606 = vmatprep.subr.mxu0 %v25
  %607 = vmatpush1.msra.mxu0 %v24
  %608 = vmatprep.subr.mxu0 %v23
  %609 = vmatpush1.msra.mxu0 %v22
  %610 = vmatprep.subr.mxu0 0.0
  %611 = vmatpush2.msra.mxu0 0.0
  %612 = vmatprep.subr.mxu0 0.0
  %613 = vmatpush2.msra.mxu0 0.0
  %614 = vmatprep.subr.mxu0 0.0
  %615 = vmatpush2.msra.mxu0 0.0
  %616 = vmatprep.subr.mxu0 0.0
  %617 = vmatpush2.msra.mxu0 0.0
  %618 = vmatprep.subr.mxu0 0.0
  %619 = vmatpush2.msra.mxu0 0.0
  %620 = vmatprep.subr.mxu0 0.0
  %621 = vmatpush2.msra.mxu0 0.0
  %622 = vmatprep.subr.mxu0 0.0
  %623 = vmatpush2.msra.mxu0 0.0
  %624 = vmatprep.subr.mxu0 0.0
  %625 = vmatpush2.msra.mxu0 0.0
  %626 = vmatprep.subr.mxu0 0.0
  %627 = vmatpush2.msra.mxu0 0.0
  %628 = vmatprep.subr.mxu0 0.0
  %629 = vmatpush2.msra.mxu0 0.0
  %630 = vmatprep.subr.mxu0 0.0
  %631 = vmatpush2.msra.mxu0 0.0
  %632 = vmatprep.subr.mxu0 0.0
  %633 = vmatpush2.msra.mxu0 0.0
  %634 = vmatprep.subr.mxu0 0.0
  %635 = vmatpush2.msra.mxu0 0.0
  %636 = vmatprep.subr.mxu0 0.0
  %637 = vmatpush2.msra.mxu0 0.0
  %638 = vmatprep.subr.mxu0 0.0
  %639 = vmatpush2.msra.mxu0 0.0
  %640 = vmatprep.subr.mxu0 0.0
  %641 = vmatpush2.msra.mxu0 0.0
  %642 = vmatprep.mubr.f32.mxu0 0.0
  %643 = vmatmul.mubr.f32.gmra.mxu0 %v489
  %v644 = vpop.f32.mrf.mxu0
  %v645 = vadd.f32 0.0, %v644
  %v646 = vpop.f32.mrf.mxu0
  %v647 = vadd.f32 0.0, %v646
  %648 = vdwg.mxu0
  %v649 = vadd.f32 %v576, %v645
  %v650 = vadd.f32 %v577, %v647
  %651 = vmatprep.subr.mxu0 0.0
  %652 = vmatpush1.msra.mxu0 %v69
  %653 = vmatprep.subr.mxu0 0.0
  %654 = vmatpush1.msra.mxu0 %v68
  %655 = vmatprep.subr.mxu0 0.0
  %656 = vmatpush1.msra.mxu0 %v67
  %657 = vmatprep.subr.mxu0 0.0
  %658 = vmatpush1.msra.mxu0 %v66
  %659 = vmatprep.subr.mxu0 0.0
  %660 = vmatpush1.msra.mxu0 %v65
  %661 = vmatprep.subr.mxu0 0.0
  %662 = vmatpush1.msra.mxu0 %v64
  %663 = vmatprep.subr.mxu0 0.0
  %664 = vmatpush1.msra.mxu0 %v63
  %665 = vmatprep.subr.mxu0 0.0
  %666 = vmatpush1.msra.mxu0 %v62
  %667 = vmatprep.subr.mxu0 0.0
  %668 = vmatpush1.msra.mxu0 %v61
  %669 = vmatprep.subr.mxu0 0.0
  %670 = vmatpush1.msra.mxu0 %v60
  %671 = vmatprep.subr.mxu0 0.0
  %672 = vmatpush1.msra.mxu0 %v59
  %673 = vmatprep.subr.mxu0 0.0
  %674 = vmatpush1.msra.mxu0 %v58
  %675 = vmatprep.subr.mxu0 0.0
  %676 = vmatpush1.msra.mxu0 %v57
  %677 = vmatprep.subr.mxu0 0.0
  %678 = vmatpush1.msra.mxu0 %v56
  %679 = vmatprep.subr.mxu0 0.0
  %680 = vmatpush1.msra.mxu0 %v55
  %681 = vmatprep.subr.mxu0 0.0
  %682 = vmatpush1.msra.mxu0 %v54
  %683 = vmatprep.subr.mxu0 0.0
  %684 = vmatpush2.msra.mxu0 %v85
  %685 = vmatprep.subr.mxu0 0.0
  %686 = vmatpush2.msra.mxu0 %v84
  %687 = vmatprep.subr.mxu0 0.0
  %688 = vmatpush2.msra.mxu0 %v83
  %689 = vmatprep.subr.mxu0 0.0
  %690 = vmatpush2.msra.mxu0 %v82
  %691 = vmatprep.subr.mxu0 0.0
  %692 = vmatpush2.msra.mxu0 %v81
  %693 = vmatprep.subr.mxu0 0.0
  %694 = vmatpush2.msra.mxu0 %v80
  %695 = vmatprep.subr.mxu0 0.0
  %696 = vmatpush2.msra.mxu0 %v79
  %697 = vmatprep.subr.mxu0 0.0
  %698 = vmatpush2.msra.mxu0 %v78
  %699 = vmatprep.subr.mxu0 0.0
  %700 = vmatpush2.msra.mxu0 %v77
  %701 = vmatprep.subr.mxu0 0.0
  %702 = vmatpush2.msra.mxu0 %v76
  %703 = vmatprep.subr.mxu0 0.0
  %704 = vmatpush2.msra.mxu0 %v75
  %705 = vmatprep.subr.mxu0 0.0
  %706 = vmatpush2.msra.mxu0 %v74
  %707 = vmatprep.subr.mxu0 0.0
  %708 = vmatpush2.msra.mxu0 %v73
  %709 = vmatprep.subr.mxu0 0.0
  %710 = vmatpush2.msra.mxu0 %v72
  %711 = vmatprep.subr.mxu0 0.0
  %712 = vmatpush2.msra.mxu0 %v71
  %713 = vmatprep.subr.mxu0 0.0
  %714 = vmatpush2.msra.mxu0 %v70
  %715 = vmatprep.mubr.f32.mxu0 %v650
  %716 = vmatmul.mubr.f32.gmra.mxu0 %v649
  %v717 = vpop.f32.mrf.mxu0
  %v718 = vadd.f32 %v170, %v717
  %v719 = vpop.f32.mrf.mxu0
  %720 = vdwg.mxu0
  %v721 = vsel %vm89, %v718, -1e+30
  %722 = vmax.xlane.f32.xlu0 %v721
  %v723 = vpop.xlane.xlu0 %722
  %v724 = vsub.f32 %v721, %v723
  %v725 = vmul.f32 %v724, 1.442695
  %v726 = vpow.pop %v725
  %v727 = vsel %vm89, %v726, 0.0
  %728 = vadd.xlane.f32.xlu0 %v727
  %v729 = vpop.xlane.xlu0 %728
  %v730 = vlog2.pop %v729
  %v731 = vmul.f32 %v730, 0.6931472
  %v732 = vsub.f32 %v724, %v731
  %s733 = scalar_lea.vmem %s5, 24
  %734 = vst [vmem:[%s733] sm:$0xff] %v732
  %s735 = scalar_lea.vmem %s0, 64
  %v736 = vld [vmem:[%s735] sm:$0xff]
  %v737 = vld [vmem:[%s735 + $0x8] sm:$0xff]
  %738 = vmatprep.subr.mxu0 %v53
  %739 = vmatpush1.msra.mxu0 %v52
  %740 = vmatprep.subr.mxu0 %v51
  %741 = vmatpush1.msra.mxu0 %v50
  %742 = vmatprep.subr.mxu0 %v49
  %743 = vmatpush1.msra.mxu0 %v48
  %744 = vmatprep.subr.mxu0 %v47
  %745 = vmatpush1.msra.mxu0 %v46
  %746 = vmatprep.subr.mxu0 %v45
  %747 = vmatpush1.msra.mxu0 %v44
  %748 = vmatprep.subr.mxu0 %v43
  %749 = vmatpush1.msra.mxu0 %v42
  %750 = vmatprep.subr.mxu0 %v41
  %751 = vmatpush1.msra.mxu0 %v40
  %752 = vmatprep.subr.mxu0 %v39
  %753 = vmatpush1.msra.mxu0 %v38
  %754 = vmatprep.subr.mxu0 %v37
  %755 = vmatpush1.msra.mxu0 %v36
  %756 = vmatprep.subr.mxu0 %v35
  %757 = vmatpush1.msra.mxu0 %v34
  %758 = vmatprep.subr.mxu0 %v33
  %759 = vmatpush1.msra.mxu0 %v32
  %760 = vmatprep.subr.mxu0 %v31
  %761 = vmatpush1.msra.mxu0 %v30
  %762 = vmatprep.subr.mxu0 %v29
  %763 = vmatpush1.msra.mxu0 %v28
  %764 = vmatprep.subr.mxu0 %v27
  %765 = vmatpush1.msra.mxu0 %v26
  %766 = vmatprep.subr.mxu0 %v25
  %767 = vmatpush1.msra.mxu0 %v24
  %768 = vmatprep.subr.mxu0 %v23
  %769 = vmatpush1.msra.mxu0 %v22
  %770 = vmatprep.subr.mxu0 0.0
  %771 = vmatpush2.msra.mxu0 0.0
  %772 = vmatprep.subr.mxu0 0.0
  %773 = vmatpush2.msra.mxu0 0.0
  %774 = vmatprep.subr.mxu0 0.0
  %775 = vmatpush2.msra.mxu0 0.0
  %776 = vmatprep.subr.mxu0 0.0
  %777 = vmatpush2.msra.mxu0 0.0
  %778 = vmatprep.subr.mxu0 0.0
  %779 = vmatpush2.msra.mxu0 0.0
  %780 = vmatprep.subr.mxu0 0.0
  %781 = vmatpush2.msra.mxu0 0.0
  %782 = vmatprep.subr.mxu0 0.0
  %783 = vmatpush2.msra.mxu0 0.0
  %784 = vmatprep.subr.mxu0 0.0
  %785 = vmatpush2.msra.mxu0 0.0
  %786 = vmatprep.subr.mxu0 0.0
  %787 = vmatpush2.msra.mxu0 0.0
  %788 = vmatprep.subr.mxu0 0.0
  %789 = vmatpush2.msra.mxu0 0.0
  %790 = vmatprep.subr.mxu0 0.0
  %791 = vmatpush2.msra.mxu0 0.0
  %792 = vmatprep.subr.mxu0 0.0
  %793 = vmatpush2.msra.mxu0 0.0
  %794 = vmatprep.subr.mxu0 0.0
  %795 = vmatpush2.msra.mxu0 0.0
  %796 = vmatprep.subr.mxu0 0.0
  %797 = vmatpush2.msra.mxu0 0.0
  %798 = vmatprep.subr.mxu0 0.0
  %799 = vmatpush2.msra.mxu0 0.0
  %800 = vmatprep.subr.mxu0 0.0
  %801 = vmatpush2.msra.mxu0 0.0
  %802 = vmatprep.mubr.f32.mxu0 0.0
  %803 = vmatmul.mubr.f32.gmra.mxu0 %v649
  %v804 = vpop.f32.mrf.mxu0
  %v805 = vadd.f32 0.0, %v804
  %v806 = vpop.f32.mrf.mxu0
  %v807 = vadd.f32 0.0, %v806
  %808 = vdwg.mxu0
  %v809 = vadd.f32 %v736, %v805
  %v810 = vadd.f32 %v737, %v807
  %811 = vmatprep.subr.mxu0 0.0
  %812 = vmatpush1.msra.mxu0 %v69
  %813 = vmatprep.subr.mxu0 0.0
  %814 = vmatpush1.msra.mxu0 %v68
  %815 = vmatprep.subr.mxu0 0.0
  %816 = vmatpush1.msra.mxu0 %v67
  %817 = vmatprep.subr.mxu0 0.0
  %818 = vmatpush1.msra.mxu0 %v66
  %819 = vmatprep.subr.mxu0 0.0
  %820 = vmatpush1.msra.mxu0 %v65
  %821 = vmatprep.subr.mxu0 0.0
  %822 = vmatpush1.msra.mxu0 %v64
  %823 = vmatprep.subr.mxu0 0.0
  %824 = vmatpush1.msra.mxu0 %v63
  %825 = vmatprep.subr.mxu0 0.0
  %826 = vmatpush1.msra.mxu0 %v62
  %827 = vmatprep.subr.mxu0 0.0
  %828 = vmatpush1.msra.mxu0 %v61
  %829 = vmatprep.subr.mxu0 0.0
  %830 = vmatpush1.msra.mxu0 %v60
  %831 = vmatprep.subr.mxu0 0.0
  %832 = vmatpush1.msra.mxu0 %v59
  %833 = vmatprep.subr.mxu0 0.0
  %834 = vmatpush1.msra.mxu0 %v58
  %835 = vmatprep.subr.mxu0 0.0
  %836 = vmatpush1.msra.mxu0 %v57
  %837 = vmatprep.subr.mxu0 0.0
  %838 = vmatpush1.msra.mxu0 %v56
  %839 = vmatprep.subr.mxu0 0.0
  %840 = vmatpush1.msra.mxu0 %v55
  %841 = vmatprep.subr.mxu0 0.0
  %842 = vmatpush1.msra.mxu0 %v54
  %843 = vmatprep.subr.mxu0 0.0
  %844 = vmatpush2.msra.mxu0 %v85
  %845 = vmatprep.subr.mxu0 0.0
  %846 = vmatpush2.msra.mxu0 %v84
  %847 = vmatprep.subr.mxu0 0.0
  %848 = vmatpush2.msra.mxu0 %v83
  %849 = vmatprep.subr.mxu0 0.0
  %850 = vmatpush2.msra.mxu0 %v82
  %851 = vmatprep.subr.mxu0 0.0
  %852 = vmatpush2.msra.mxu0 %v81
  %853 = vmatprep.subr.mxu0 0.0
  %854 = vmatpush2.msra.mxu0 %v80
  %855 = vmatprep.subr.mxu0 0.0
  %856 = vmatpush2.msra.mxu0 %v79
  %857 = vmatprep.subr.mxu0 0.0
  %858 = vmatpush2.msra.mxu0 %v78
  %859 = vmatprep.subr.mxu0 0.0
  %860 = vmatpush2.msra.mxu0 %v77
  %861 = vmatprep.subr.mxu0 0.0
  %862 = vmatpush2.msra.mxu0 %v76
  %863 = vmatprep.subr.mxu0 0.0
  %864 = vmatpush2.msra.mxu0 %v75
  %865 = vmatprep.subr.mxu0 0.0
  %866 = vmatpush2.msra.mxu0 %v74
  %867 = vmatprep.subr.mxu0 0.0
  %868 = vmatpush2.msra.mxu0 %v73
  %869 = vmatprep.subr.mxu0 0.0
  %870 = vmatpush2.msra.mxu0 %v72
  %871 = vmatprep.subr.mxu0 0.0
  %872 = vmatpush2.msra.mxu0 %v71
  %873 = vmatprep.subr.mxu0 0.0
  %874 = vmatpush2.msra.mxu0 %v70
  %875 = vmatprep.mubr.f32.mxu0 %v810
  %876 = vmatmul.mubr.f32.gmra.mxu0 %v809
  %v877 = vpop.f32.mrf.mxu0
  %v878 = vadd.f32 %v170, %v877
  %v879 = vpop.f32.mrf.mxu0
  %880 = vdwg.mxu0
  %v881 = vsel %vm89, %v878, -1e+30
  %882 = vmax.xlane.f32.xlu0 %v881
  %v883 = vpop.xlane.xlu0 %882
  %v884 = vsub.f32 %v881, %v883
  %v885 = vmul.f32 %v884, 1.442695
  %v886 = vpow.pop %v885
  %v887 = vsel %vm89, %v886, 0.0
  %888 = vadd.xlane.f32.xlu0 %v887
  %v889 = vpop.xlane.xlu0 %888
  %v890 = vlog2.pop %v889
  %v891 = vmul.f32 %v890, 0.6931472
  %v892 = vsub.f32 %v884, %v891
  %s893 = scalar_lea.vmem %s5, 32
  %894 = vst [vmem:[%s893] sm:$0xff] %v892
  %s895 = scalar_lea.vmem %s0, 80
  %v896 = vld [vmem:[%s895] sm:$0xff]
  %v897 = vld [vmem:[%s895 + $0x8] sm:$0xff]
  %898 = vmatprep.subr.mxu0 %v53
  %899 = vmatpush1.msra.mxu0 %v52
  %900 = vmatprep.subr.mxu0 %v51
  %901 = vmatpush1.msra.mxu0 %v50
  %902 = vmatprep.subr.mxu0 %v49
  %903 = vmatpush1.msra.mxu0 %v48
  %904 = vmatprep.subr.mxu0 %v47
  %905 = vmatpush1.msra.mxu0 %v46
  %906 = vmatprep.subr.mxu0 %v45
  %907 = vmatpush1.msra.mxu0 %v44
  %908 = vmatprep.subr.mxu0 %v43
  %909 = vmatpush1.msra.mxu0 %v42
  %910 = vmatprep.subr.mxu0 %v41
  %911 = vmatpush1.msra.mxu0 %v40
  %912 = vmatprep.subr.mxu0 %v39
  %913 = vmatpush1.msra.mxu0 %v38
  %914 = vmatprep.subr.mxu0 %v37
  %915 = vmatpush1.msra.mxu0 %v36
  %916 = vmatprep.subr.mxu0 %v35
  %917 = vmatpush1.msra.mxu0 %v34
  %918 = vmatprep.subr.mxu0 %v33
  %919 = vmatpush1.msra.mxu0 %v32
  %920 = vmatprep.subr.mxu0 %v31
  %921 = vmatpush1.msra.mxu0 %v30
  %922 = vmatprep.subr.mxu0 %v29
  %923 = vmatpush1.msra.mxu0 %v28
  %924 = vmatprep.subr.mxu0 %v27
  %925 = vmatpush1.msra.mxu0 %v26
  %926 = vmatprep.subr.mxu0 %v25
  %927 = vmatpush1.msra.mxu0 %v24
  %928 = vmatprep.subr.mxu0 %v23
  %929 = vmatpush1.msra.mxu0 %v22
  %930 = vmatprep.subr.mxu0 0.0
  %931 = vmatpush2.msra.mxu0 0.0
  %932 = vmatprep.subr.mxu0 0.0
  %933 = vmatpush2.msra.mxu0 0.0
  %934 = vmatprep.subr.mxu0 0.0
  %935 = vmatpush2.msra.mxu0 0.0
  %936 = vmatprep.subr.mxu0 0.0
  %937 = vmatpush2.msra.mxu0 0.0
  %938 = vmatprep.subr.mxu0 0.0
  %939 = vmatpush2.msra.mxu0 0.0
  %940 = vmatprep.subr.mxu0 0.0
  %941 = vmatpush2.msra.mxu0 0.0
  %942 = vmatprep.subr.mxu0 0.0
  %943 = vmatpush2.msra.mxu0 0.0
  %944 = vmatprep.subr.mxu0 0.0
  %945 = vmatpush2.msra.mxu0 0.0
  %946 = vmatprep.subr.mxu0 0.0
  %947 = vmatpush2.msra.mxu0 0.0
  %948 = vmatprep.subr.mxu0 0.0
  %949 = vmatpush2.msra.mxu0 0.0
  %950 = vmatprep.subr.mxu0 0.0
  %951 = vmatpush2.msra.mxu0 0.0
  %952 = vmatprep.subr.mxu0 0.0
  %953 = vmatpush2.msra.mxu0 0.0
  %954 = vmatprep.subr.mxu0 0.0
  %955 = vmatpush2.msra.mxu0 0.0
  %956 = vmatprep.subr.mxu0 0.0
  %957 = vmatpush2.msra.mxu0 0.0
  %958 = vmatprep.subr.mxu0 0.0
  %959 = vmatpush2.msra.mxu0 0.0
  %960 = vmatprep.subr.mxu0 0.0
  %961 = vmatpush2.msra.mxu0 0.0
  %962 = vmatprep.mubr.f32.mxu0 0.0
  %963 = vmatmul.mubr.f32.gmra.mxu0 %v809
  %v964 = vpop.f32.mrf.mxu0
  %v965 = vadd.f32 0.0, %v964
  %v966 = vpop.f32.mrf.mxu0
  %v967 = vadd.f32 0.0, %v966
  %968 = vdwg.mxu0
  %v969 = vadd.f32 %v896, %v965
  %v970 = vadd.f32 %v897, %v967
  %971 = vmatprep.subr.mxu0 0.0
  %972 = vmatpush1.msra.mxu0 %v69
  %973 = vmatprep.subr.mxu0 0.0
  %974 = vmatpush1.msra.mxu0 %v68
  %975 = vmatprep.subr.mxu0 0.0
  %976 = vmatpush1.msra.mxu0 %v67
  %977 = vmatprep.subr.mxu0 0.0
  %978 = vmatpush1.msra.mxu0 %v66
  %979 = vmatprep.subr.mxu0 0.0
  %980 = vmatpush1.msra.mxu0 %v65
  %981 = vmatprep.subr.mxu0 0.0
  %982 = vmatpush1.msra.mxu0 %v64
  %983 = vmatprep.subr.mxu0 0.0
  %984 = vmatpush1.msra.mxu0 %v63
  %985 = vmatprep.subr.mxu0 0.0
  %986 = vmatpush1.msra.mxu0 %v62
  %987 = vmatprep.subr.mxu0 0.0
  %988 = vmatpush1.msra.mxu0 %v61
  %989 = vmatprep.subr.mxu0 0.0
  %990 = vmatpush1.msra.mxu0 %v60
  %991 = vmatprep.subr.mxu0 0.0
  %992 = vmatpush1.msra.mxu0 %v59
  %993 = vmatprep.subr.mxu0 0.0
  %994 = vmatpush1.msra.mxu0 %v58
  %995 = vmatprep.subr.mxu0 0.0
  %996 = vmatpush1.msra.mxu0 %v57
  %997 = vmatprep.subr.mxu0 0.0
  %998 = vmatpush1.msra.mxu0 %v56
  %999 = vmatprep.subr.mxu0 0.0
  %1000 = vmatpush1.msra.mxu0 %v55
  %1001 = vmatprep.subr.mxu0 0.0
  %1002 = vmatpush1.msra.mxu0 %v54
  %1003 = vmatprep.subr.mxu0 0.0
  %1004 = vmatpush2.msra.mxu0 %v85
  %1005 = vmatprep.subr.mxu0 0.0
  %1006 = vmatpush2.msra.mxu0 %v84
  %1007 = vmatprep.subr.mxu0 0.0
  %1008 = vmatpush2.msra.mxu0 %v83
  %1009 = vmatprep.subr.mxu0 0.0
  %1010 = vmatpush2.msra.mxu0 %v82
  %1011 = vmatprep.subr.mxu0 0.0
  %1012 = vmatpush2.msra.mxu0 %v81
  %1013 = vmatprep.subr.mxu0 0.0
  %1014 = vmatpush2.msra.mxu0 %v80
  %1015 = vmatprep.subr.mxu0 0.0
  %1016 = vmatpush2.msra.mxu0 %v79
  %1017 = vmatprep.subr.mxu0 0.0
  %1018 = vmatpush2.msra.mxu0 %v78
  %1019 = vmatprep.subr.mxu0 0.0
  %1020 = vmatpush2.msra.mxu0 %v77
  %1021 = vmatprep.subr.mxu0 0.0
  %1022 = vmatpush2.msra.mxu0 %v76
  %1023 = vmatprep.subr.mxu0 0.0
  %1024 = vmatpush2.msra.mxu0 %v75
  %1025 = vmatprep.subr.mxu0 0.0
  %1026 = vmatpush2.msra.mxu0 %v74
  %1027 = vmatprep.subr.mxu0 0.0
  %1028 = vmatpush2.msra.mxu0 %v73
  %1029 = vmatprep.subr.mxu0 0.0
  %1030 = vmatpush2.msra.mxu0 %v72
  %1031 = vmatprep.subr.mxu0 0.0
  %1032 = vmatpush2.msra.mxu0 %v71
  %1033 = vmatprep.subr.mxu0 0.0
  %1034 = vmatpush2.msra.mxu0 %v70
  %1035 = vmatprep.mubr.f32.mxu0 %v970
  %1036 = vmatmul.mubr.f32.gmra.mxu0 %v969
  %v1037 = vpop.f32.mrf.mxu0
  %v1038 = vadd.f32 %v170, %v1037
  %v1039 = vpop.f32.mrf.mxu0
  %1040 = vdwg.mxu0
  %v1041 = vsel %vm89, %v1038, -1e+30
  %1042 = vmax.xlane.f32.xlu0 %v1041
  %v1043 = vpop.xlane.xlu0 %1042
  %v1044 = vsub.f32 %v1041, %v1043
  %v1045 = vmul.f32 %v1044, 1.442695
  %v1046 = vpow.pop %v1045
  %v1047 = vsel %vm89, %v1046, 0.0
  %1048 = vadd.xlane.f32.xlu0 %v1047
  %v1049 = vpop.xlane.xlu0 %1048
  %v1050 = vlog2.pop %v1049
  %v1051 = vmul.f32 %v1050, 0.6931472
  %v1052 = vsub.f32 %v1044, %v1051
  %s1053 = scalar_lea.vmem %s5, 40
  %1054 = vst [vmem:[%s1053] sm:$0xff] %v1052
  %s1055 = scalar_lea.vmem %s0, 96
  %v1056 = vld [vmem:[%s1055] sm:$0xff]
  %v1057 = vld [vmem:[%s1055 + $0x8] sm:$0xff]
  %1058 = vmatprep.subr.mxu0 %v53
  %1059 = vmatpush1.msra.mxu0 %v52
  %1060 = vmatprep.subr.mxu0 %v51
  %1061 = vmatpush1.msra.mxu0 %v50
  %1062 = vmatprep.subr.mxu0 %v49
  %1063 = vmatpush1.msra.mxu0 %v48
  %1064 = vmatprep.subr.mxu0 %v47
  %1065 = vmatpush1.msra.mxu0 %v46
  %1066 = vmatprep.subr.mxu0 %v45
  %1067 = vmatpush1.msra.mxu0 %v44
  %1068 = vmatprep.subr.mxu0 %v43
  %1069 = vmatpush1.msra.mxu0 %v42
  %1070 = vmatprep.subr.mxu0 %v41
  %1071 = vmatpush1.msra.mxu0 %v40
  %1072 = vmatprep.subr.mxu0 %v39
  %1073 = vmatpush1.msra.mxu0 %v38
  %1074 = vmatprep.subr.mxu0 %v37
  %1075 = vmatpush1.msra.mxu0 %v36
  %1076 = vmatprep.subr.mxu0 %v35
  %1077 = vmatpush1.msra.mxu0 %v34
  %1078 = vmatprep.subr.mxu0 %v33
  %1079 = vmatpush1.msra.mxu0 %v32
  %1080 = vmatprep.subr.mxu0 %v31
  %1081 = vmatpush1.msra.mxu0 %v30
  %1082 = vmatprep.subr.mxu0 %v29
  %1083 = vmatpush1.msra.mxu0 %v28
  %1084 = vmatprep.subr.mxu0 %v27
  %1085 = vmatpush1.msra.mxu0 %v26
  %1086 = vmatprep.subr.mxu0 %v25
  %1087 = vmatpush1.msra.mxu0 %v24
  %1088 = vmatprep.subr.mxu0 %v23
  %1089 = vmatpush1.msra.mxu0 %v22
  %1090 = vmatprep.subr.mxu0 0.0
  %1091 = vmatpush2.msra.mxu0 0.0
  %1092 = vmatprep.subr.mxu0 0.0
  %1093 = vmatpush2.msra.mxu0 0.0
  %1094 = vmatprep.subr.mxu0 0.0
  %1095 = vmatpush2.msra.mxu0 0.0
  %1096 = vmatprep.subr.mxu0 0.0
  %1097 = vmatpush2.msra.mxu0 0.0
  %1098 = vmatprep.subr.mxu0 0.0
  %1099 = vmatpush2.msra.mxu0 0.0
  %1100 = vmatprep.subr.mxu0 0.0
  %1101 = vmatpush2.msra.mxu0 0.0
  %1102 = vmatprep.subr.mxu0 0.0
  %1103 = vmatpush2.msra.mxu0 0.0
  %1104 = vmatprep.subr.mxu0 0.0
  %1105 = vmatpush2.msra.mxu0 0.0
  %1106 = vmatprep.subr.mxu0 0.0
  %1107 = vmatpush2.msra.mxu0 0.0
  %1108 = vmatprep.subr.mxu0 0.0
  %1109 = vmatpush2.msra.mxu0 0.0
  %1110 = vmatprep.subr.mxu0 0.0
  %1111 = vmatpush2.msra.mxu0 0.0
  %1112 = vmatprep.subr.mxu0 0.0
  %1113 = vmatpush2.msra.mxu0 0.0
  %1114 = vmatprep.subr.mxu0 0.0
  %1115 = vmatpush2.msra.mxu0 0.0
  %1116 = vmatprep.subr.mxu0 0.0
  %1117 = vmatpush2.msra.mxu0 0.0
  %1118 = vmatprep.subr.mxu0 0.0
  %1119 = vmatpush2.msra.mxu0 0.0
  %1120 = vmatprep.subr.mxu0 0.0
  %1121 = vmatpush2.msra.mxu0 0.0
  %1122 = vmatprep.mubr.f32.mxu0 0.0
  %1123 = vmatmul.mubr.f32.gmra.mxu0 %v969
  %v1124 = vpop.f32.mrf.mxu0
  %v1125 = vadd.f32 0.0, %v1124
  %v1126 = vpop.f32.mrf.mxu0
  %v1127 = vadd.f32 0.0, %v1126
  %1128 = vdwg.mxu0
  %v1129 = vadd.f32 %v1056, %v1125
  %v1130 = vadd.f32 %v1057, %v1127
  %1131 = vmatprep.subr.mxu0 0.0
  %1132 = vmatpush1.msra.mxu0 %v69
  %1133 = vmatprep.subr.mxu0 0.0
  %1134 = vmatpush1.msra.mxu0 %v68
  %1135 = vmatprep.subr.mxu0 0.0
  %1136 = vmatpush1.msra.mxu0 %v67
  %1137 = vmatprep.subr.mxu0 0.0
  %1138 = vmatpush1.msra.mxu0 %v66
  %1139 = vmatprep.subr.mxu0 0.0
  %1140 = vmatpush1.msra.mxu0 %v65
  %1141 = vmatprep.subr.mxu0 0.0
  %1142 = vmatpush1.msra.mxu0 %v64
  %1143 = vmatprep.subr.mxu0 0.0
  %1144 = vmatpush1.msra.mxu0 %v63
  %1145 = vmatprep.subr.mxu0 0.0
  %1146 = vmatpush1.msra.mxu0 %v62
  %1147 = vmatprep.subr.mxu0 0.0
  %1148 = vmatpush1.msra.mxu0 %v61
  %1149 = vmatprep.subr.mxu0 0.0
  %1150 = vmatpush1.msra.mxu0 %v60
  %1151 = vmatprep.subr.mxu0 0.0
  %1152 = vmatpush1.msra.mxu0 %v59
  %1153 = vmatprep.subr.mxu0 0.0
  %1154 = vmatpush1.msra.mxu0 %v58
  %1155 = vmatprep.subr.mxu0 0.0
  %1156 = vmatpush1.msra.mxu0 %v57
  %1157 = vmatprep.subr.mxu0 0.0
  %1158 = vmatpush1.msra.mxu0 %v56
  %1159 = vmatprep.subr.mxu0 0.0
  %1160 = vmatpush1.msra.mxu0 %v55
  %1161 = vmatprep.subr.mxu0 0.0
  %1162 = vmatpush1.msra.mxu0 %v54
  %1163 = vmatprep.subr.mxu0 0.0
  %1164 = vmatpush2.msra.mxu0 %v85
  %1165 = vmatprep.subr.mxu0 0.0
  %1166 = vmatpush2.msra.mxu0 %v84
  %1167 = vmatprep.subr.mxu0 0.0
  %1168 = vmatpush2.msra.mxu0 %v83
  %1169 = vmatprep.subr.mxu0 0.0
  %1170 = vmatpush2.msra.mxu0 %v82
  %1171 = vmatprep.subr.mxu0 0.0
  %1172 = vmatpush2.msra.mxu0 %v81
  %1173 = vmatprep.subr.mxu0 0.0
  %1174 = vmatpush2.msra.mxu0 %v80
  %1175 = vmatprep.subr.mxu0 0.0
  %1176 = vmatpush2.msra.mxu0 %v79
  %1177 = vmatprep.subr.mxu0 0.0
  %1178 = vmatpush2.msra.mxu0 %v78
  %1179 = vmatprep.subr.mxu0 0.0
  %1180 = vmatpush2.msra.mxu0 %v77
  %1181 = vmatprep.subr.mxu0 0.0
  %1182 = vmatpush2.msra.mxu0 %v76
  %1183 = vmatprep.subr.mxu0 0.0
  %1184 = vmatpush2.msra.mxu0 %v75
  %1185 = vmatprep.subr.mxu0 0.0
  %1186 = vmatpush2.msra.mxu0 %v74
  %1187 = vmatprep.subr.mxu0 0.0
  %1188 = vmatpush2.msra.mxu0 %v73
  %1189 = vmatprep.subr.mxu0 0.0
  %1190 = vmatpush2.msra.mxu0 %v72
  %1191 = vmatprep.subr.mxu0 0.0
  %1192 = vmatpush2.msra.mxu0 %v71
  %1193 = vmatprep.subr.mxu0 0.0
  %1194 = vmatpush2.msra.mxu0 %v70
  %1195 = vmatprep.mubr.f32.mxu0 %v1130
  %1196 = vmatmul.mubr.f32.gmra.mxu0 %v1129
  %v1197 = vpop.f32.mrf.mxu0
  %v1198 = vadd.f32 %v170, %v1197
  %v1199 = vpop.f32.mrf.mxu0
  %1200 = vdwg.mxu0
  %v1201 = vsel %vm89, %v1198, -1e+30
  %1202 = vmax.xlane.f32.xlu0 %v1201
  %v1203 = vpop.xlane.xlu0 %1202
  %v1204 = vsub.f32 %v1201, %v1203
  %v1205 = vmul.f32 %v1204, 1.442695
  %v1206 = vpow.pop %v1205
  %v1207 = vsel %vm89, %v1206, 0.0
  %1208 = vadd.xlane.f32.xlu0 %v1207
  %v1209 = vpop.xlane.xlu0 %1208
  %v1210 = vlog2.pop %v1209
  %v1211 = vmul.f32 %v1210, 0.6931472
  %v1212 = vsub.f32 %v1204, %v1211
  %s1213 = scalar_lea.vmem %s5, 48
  %1214 = vst [vmem:[%s1213] sm:$0xff] %v1212
  %s1215 = scalar_lea.vmem %s0, 112
  %v1216 = vld [vmem:[%s1215] sm:$0xff]
  %v1217 = vld [vmem:[%s1215 + $0x8] sm:$0xff]
  %1218 = vmatprep.subr.mxu0 %v53
  %1219 = vmatpush1.msra.mxu0 %v52
  %1220 = vmatprep.subr.mxu0 %v51
  %1221 = vmatpush1.msra.mxu0 %v50
  %1222 = vmatprep.subr.mxu0 %v49
  %1223 = vmatpush1.msra.mxu0 %v48
  %1224 = vmatprep.subr.mxu0 %v47
  %1225 = vmatpush1.msra.mxu0 %v46
  %1226 = vmatprep.subr.mxu0 %v45
  %1227 = vmatpush1.msra.mxu0 %v44
  %1228 = vmatprep.subr.mxu0 %v43
  %1229 = vmatpush1.msra.mxu0 %v42
  %1230 = vmatprep.subr.mxu0 %v41
  %1231 = vmatpush1.msra.mxu0 %v40
  %1232 = vmatprep.subr.mxu0 %v39
  %1233 = vmatpush1.msra.mxu0 %v38
  %1234 = vmatprep.subr.mxu0 %v37
  %1235 = vmatpush1.msra.mxu0 %v36
  %1236 = vmatprep.subr.mxu0 %v35
  %1237 = vmatpush1.msra.mxu0 %v34
  %1238 = vmatprep.subr.mxu0 %v33
  %1239 = vmatpush1.msra.mxu0 %v32
  %1240 = vmatprep.subr.mxu0 %v31
  %1241 = vmatpush1.msra.mxu0 %v30
  %1242 = vmatprep.subr.mxu0 %v29
  %1243 = vmatpush1.msra.mxu0 %v28
  %1244 = vmatprep.subr.mxu0 %v27
  %1245 = vmatpush1.msra.mxu0 %v26
  %1246 = vmatprep.subr.mxu0 %v25
  %1247 = vmatpush1.msra.mxu0 %v24
  %1248 = vmatprep.subr.mxu0 %v23
  %1249 = vmatpush1.msra.mxu0 %v22
  %1250 = vmatprep.subr.mxu0 0.0
  %1251 = vmatpush2.msra.mxu0 0.0
  %1252 = vmatprep.subr.mxu0 0.0
  %1253 = vmatpush2.msra.mxu0 0.0
  %1254 = vmatprep.subr.mxu0 0.0
  %1255 = vmatpush2.msra.mxu0 0.0
  %1256 = vmatprep.subr.mxu0 0.0
  %1257 = vmatpush2.msra.mxu0 0.0
  %1258 = vmatprep.subr.mxu0 0.0
  %1259 = vmatpush2.msra.mxu0 0.0
  %1260 = vmatprep.subr.mxu0 0.0
  %1261 = vmatpush2.msra.mxu0 0.0
  %1262 = vmatprep.subr.mxu0 0.0
  %1263 = vmatpush2.msra.mxu0 0.0
  %1264 = vmatprep.subr.mxu0 0.0
  %1265 = vmatpush2.msra.mxu0 0.0
  %1266 = vmatprep.subr.mxu0 0.0
  %1267 = vmatpush2.msra.mxu0 0.0
  %1268 = vmatprep.subr.mxu0 0.0
  %1269 = vmatpush2.msra.mxu0 0.0
  %1270 = vmatprep.subr.mxu0 0.0
  %1271 = vmatpush2.msra.mxu0 0.0
  %1272 = vmatprep.subr.mxu0 0.0
  %1273 = vmatpush2.msra.mxu0 0.0
  %1274 = vmatprep.subr.mxu0 0.0
  %1275 = vmatpush2.msra.mxu0 0.0
  %1276 = vmatprep.subr.mxu0 0.0
  %1277 = vmatpush2.msra.mxu0 0.0
  %1278 = vmatprep.subr.mxu0 0.0
  %1279 = vmatpush2.msra.mxu0 0.0
  %1280 = vmatprep.subr.mxu0 0.0
  %1281 = vmatpush2.msra.mxu0 0.0
  %1282 = vmatprep.mubr.f32.mxu0 0.0
  %1283 = vmatmul.mubr.f32.gmra.mxu0 %v1129
  %v1284 = vpop.f32.mrf.mxu0
  %v1285 = vadd.f32 0.0, %v1284
  %v1286 = vpop.f32.mrf.mxu0
  %v1287 = vadd.f32 0.0, %v1286
  %1288 = vdwg.mxu0
  %v1289 = vadd.f32 %v1216, %v1285
  %v1290 = vadd.f32 %v1217, %v1287
  %1291 = vmatprep.subr.mxu0 0.0
  %1292 = vmatpush1.msra.mxu0 %v69
  %1293 = vmatprep.subr.mxu0 0.0
  %1294 = vmatpush1.msra.mxu0 %v68
  %1295 = vmatprep.subr.mxu0 0.0
  %1296 = vmatpush1.msra.mxu0 %v67
  %1297 = vmatprep.subr.mxu0 0.0
  %1298 = vmatpush1.msra.mxu0 %v66
  %1299 = vmatprep.subr.mxu0 0.0
  %1300 = vmatpush1.msra.mxu0 %v65
  %1301 = vmatprep.subr.mxu0 0.0
  %1302 = vmatpush1.msra.mxu0 %v64
  %1303 = vmatprep.subr.mxu0 0.0
  %1304 = vmatpush1.msra.mxu0 %v63
  %1305 = vmatprep.subr.mxu0 0.0
  %1306 = vmatpush1.msra.mxu0 %v62
  %1307 = vmatprep.subr.mxu0 0.0
  %1308 = vmatpush1.msra.mxu0 %v61
  %1309 = vmatprep.subr.mxu0 0.0
  %1310 = vmatpush1.msra.mxu0 %v60
  %1311 = vmatprep.subr.mxu0 0.0
  %1312 = vmatpush1.msra.mxu0 %v59
  %1313 = vmatprep.subr.mxu0 0.0
  %1314 = vmatpush1.msra.mxu0 %v58
  %1315 = vmatprep.subr.mxu0 0.0
  %1316 = vmatpush1.msra.mxu0 %v57
  %1317 = vmatprep.subr.mxu0 0.0
  %1318 = vmatpush1.msra.mxu0 %v56
  %1319 = vmatprep.subr.mxu0 0.0
  %1320 = vmatpush1.msra.mxu0 %v55
  %1321 = vmatprep.subr.mxu0 0.0
  %1322 = vmatpush1.msra.mxu0 %v54
  %1323 = vmatprep.subr.mxu0 0.0
  %1324 = vmatpush2.msra.mxu0 %v85
  %1325 = vmatprep.subr.mxu0 0.0
  %1326 = vmatpush2.msra.mxu0 %v84
  %1327 = vmatprep.subr.mxu0 0.0
  %1328 = vmatpush2.msra.mxu0 %v83
  %1329 = vmatprep.subr.mxu0 0.0
  %1330 = vmatpush2.msra.mxu0 %v82
  %1331 = vmatprep.subr.mxu0 0.0
  %1332 = vmatpush2.msra.mxu0 %v81
  %1333 = vmatprep.subr.mxu0 0.0
  %1334 = vmatpush2.msra.mxu0 %v80
  %1335 = vmatprep.subr.mxu0 0.0
  %1336 = vmatpush2.msra.mxu0 %v79
  %1337 = vmatprep.subr.mxu0 0.0
  %1338 = vmatpush2.msra.mxu0 %v78
  %1339 = vmatprep.subr.mxu0 0.0
  %1340 = vmatpush2.msra.mxu0 %v77
  %1341 = vmatprep.subr.mxu0 0.0
  %1342 = vmatpush2.msra.mxu0 %v76
  %1343 = vmatprep.subr.mxu0 0.0
  %1344 = vmatpush2.msra.mxu0 %v75
  %1345 = vmatprep.subr.mxu0 0.0
  %1346 = vmatpush2.msra.mxu0 %v74
  %1347 = vmatprep.subr.mxu0 0.0
  %1348 = vmatpush2.msra.mxu0 %v73
  %1349 = vmatprep.subr.mxu0 0.0
  %1350 = vmatpush2.msra.mxu0 %v72
  %1351 = vmatprep.subr.mxu0 0.0
  %1352 = vmatpush2.msra.mxu0 %v71
  %1353 = vmatprep.subr.mxu0 0.0
  %1354 = vmatpush2.msra.mxu0 %v70
  %1355 = vmatprep.mubr.f32.mxu0 %v1290
  %1356 = vmatmul.mubr.f32.gmra.mxu0 %v1289
  %v1357 = vpop.f32.mrf.mxu0
  %v1358 = vadd.f32 %v170, %v1357
  %v1359 = vpop.f32.mrf.mxu0
  %1360 = vdwg.mxu0
  %v1361 = vsel %vm89, %v1358, -1e+30
  %1362 = vmax.xlane.f32.xlu0 %v1361
  %v1363 = vpop.xlane.xlu0 %1362
  %v1364 = vsub.f32 %v1361, %v1363
  %v1365 = vmul.f32 %v1364, 1.442695
  %v1366 = vpow.pop %v1365
  %v1367 = vsel %vm89, %v1366, 0.0
  %1368 = vadd.xlane.f32.xlu0 %v1367
  %v1369 = vpop.xlane.xlu0 %1368
  %v1370 = vlog2.pop %v1369
  %v1371 = vmul.f32 %v1370, 0.6931472
  %v1372 = vsub.f32 %v1364, %v1371
  %s1373 = scalar_lea.vmem %s5, 56
  %1374 = vst [vmem:[%s1373] sm:$0xff] %v1372
  %1375 = vst [vmem:[%s6] sm:$0xff] %v1289
  // Predicated region
  $region22: #{rnn_sequence_forward.1} parent=0 // pred_check
    _
  $region23: #{rnn_sequence_forward.1} parent=0 // pred_check_branch
    %1377 = sbr.rel (0) target = $region25
  $region24: #{rnn_sequence_forward.1} parent=0 // pred_region
    _
  $region25: #{rnn_sequence_forward.1} parent=0 // pred_fallthru
    _
  // Predicated region
  $region26: #{rnn_sequence_forward.1} parent=0 // pred_check
    _
  $region27: #{rnn_sequence_forward.1} parent=0 // pred_check_branch
    %1379 = sbr.rel (0) target = $region29
  $region28: #{rnn_sequence_forward.1} parent=0 // pred_region
    _
  $region29: #{rnn_sequence_forward.1} parent=0 // pred_fallthru
    _
  // Predicated region
  $region30: #{rnn_sequence_forward.1} parent=0 // pred_check
    _
  $region31: #{rnn_sequence_forward.1} parent=0 // pred_check_branch
    %1381 = sbr.rel (0) target = $region33
  $region32: #{rnn_sequence_forward.1} parent=0 // pred_region
    _
  $region33: #{rnn_sequence_forward.1} parent=0 // pred_fallthru
    _
  // Predicated region
  $region34: #{rnn_sequence_forward.1} parent=0 // pred_check
    _
  $region35: #{rnn_sequence_forward.1} parent=0 // pred_check_branch
    %1383 = sbr.rel (0) target = $region37
  $region36: #{rnn_sequence_forward.1} parent=0 // pred_region
    _
  $region37: #{rnn_sequence_forward.1} parent=0 // pred_fallthru
    _

</llo_original>
